<compile_context>
chip_gen: v7x
topology: tpu7x:2x2x1
jax: 0.10.0
libtpu: 0.0.40
codegen_flags: <defaults>
</compile_context>

<pallas_src>
import functools
import numpy as np
import jax
import jax.numpy as jnp
from jax.experimental import pallas as pl
from jax.experimental.pallas import tpu as pltpu

PAD = 0  # Constants.PAD


# ------------------------------- Pallas kernel ------------------------------

def _layer_norm(z, g, b, eps):
    # LaMP LayerNormalization: unbiased std (divide by d-1), eps added to std.
    d = z.shape[-1]
    mu = jnp.mean(z, axis=-1, keepdims=True)
    diff = z - mu
    sigma = jnp.sqrt(jnp.sum(diff * diff, axis=-1, keepdims=True) / (d - 1))
    # divide moved to the EUP via approx reciprocal (free slot).
    return diff * pl.reciprocal(sigma + eps, approx=True) * g + b


def _encoder_stack_kernel(seq_ref, x_ref,
                          wqkv_ref, pw_ref, w1_ref, w2_ref,
                          vecs_ref, b1_ref,
                          o_ref, act_ref,
                          *, n_head, d_k, d_v, inv_temper, eps):
    """One grid step = (batch block, layer). Activation persists in VMEM scratch."""
    layer = pl.program_id(1)
    TB, _, L = seq_ref.shape            # (TB, 1, L) raw token ids of this batch block
    M, D = x_ref.shape                  # pre-flattened (TB*L, D) embedded input
    H = n_head

    @pl.when(layer == 0)
    def _():
        act_ref[...] = x_ref[...].astype(jnp.float32)

    x = act_ref[...]                    # (M, D) f32 running activation
    pad = seq_ref[...] == PAD           # (TB, 1, L): key positions that are PAD

    vecs = vecs_ref[0]                  # (8, D) packed per-layer vectors
    proj_b, g1, be1 = vecs[0:1, :], vecs[1:2, :], vecs[2:3, :]
    b2, g2, be2 = vecs[3:4, :], vecs[4:5, :], vecs[5:6, :]

    # ---- MultiHeadAttention -------------------------------------------------
    # fused QKV projection: single MXU pass, M = TB*L rows, bf16 operands / f32 acc
    xb = x.astype(jnp.bfloat16)
    qkv = jnp.dot(xb, wqkv_ref[0], preferred_element_type=jnp.float32)   # (M, H*(2dk+dv))
    q_all = qkv[:, : H * d_k].astype(jnp.bfloat16)
    k_all = qkv[:, H * d_k: 2 * H * d_k].astype(jnp.bfloat16)
    v_all = qkv[:, 2 * H * d_k:].astype(jnp.bfloat16)

    ctx_heads = []
    # TODO(synk): for production head counts / seq lens switch this static unroll
    #             to lax.fori_loop(unroll=True) writing ctx into a VMEM scratch to
    #             bound vreg live ranges (Python `for` does not bound them).
    for h in range(H):
        q = q_all[:, h * d_k:(h + 1) * d_k].reshape(TB, L, d_k)
        k = k_all[:, h * d_k:(h + 1) * d_k].reshape(TB, L, d_k)
        v = v_all[:, h * d_v:(h + 1) * d_v].reshape(TB, L, d_v)
        s = jnp.einsum('bqd,bkd->bqk', q, k,
                       preferred_element_type=jnp.float32) * inv_temper   # (TB, L, L)
        # masked_fill_(attn_mask, -inf) finite surrogate (all-pad rows become
        # uniform attention instead of NaN; harmless for pad rows downstream).
        s = jnp.where(pad, -1e9, s)
        s = s - jnp.max(s, axis=-1, keepdims=True)
        p = jnp.exp(s)
        p = p * pl.reciprocal(jnp.sum(p, axis=-1, keepdims=True), approx=True)
        ctx = jnp.einsum('bqk,bkd->bqd', p.astype(jnp.bfloat16), v,
                         preferred_element_type=jnp.float32)              # (TB, L, dv)
        ctx_heads.append(ctx.reshape(M, d_v))

    # concat-heads once, then a SINGLE output projection with K = H*d_v
    ctx_all = jnp.concatenate(ctx_heads, axis=-1).astype(jnp.bfloat16)    # (M, H*dv)
    attn_out = jnp.dot(ctx_all, pw_ref[0],
                       preferred_element_type=jnp.float32) + proj_b

    h1 = _layer_norm(attn_out + x, g1, be1, eps)                          # residual + LN

    # ---- PositionwiseFeedForward (1x1 conv == linear) ------------------------
    ff = jnp.dot(h1.astype(jnp.bfloat16), w1_ref[0],
                 preferred_element_type=jnp.float32) + b1_ref[0]
    ff = jnp.maximum(ff, 0.0)
    ff = jnp.dot(ff.astype(jnp.bfloat16), w2_ref[0],
                 preferred_element_type=jnp.float32) + b2
    out = _layer_norm(ff + h1, g2, be2, eps)                              # residual + LN

    act_ref[...] = out

    @pl.when(layer == pl.num_programs(1) - 1)
    def _():
        o_ref[...] = out.astype(o_ref.dtype)


def _pick_batch_block(B, L):
    """Largest divisor TB of B with TB*L <= 1024 rows (fills the MXU M dim while
    keeping the activation block/scratch modest).  For v7x prefer even B//TB when
    possible so the parallel batch axis splits across both TensorCores."""
    best = 1
    for tb in range(1, B + 1):
        if B % tb == 0 and tb * L <= 1024:
            best = tb
    return best


def encoder_stack(params, enc, src_seq, *, n_layers, n_head, d_k, d_v, d_model):
    B, L, D = enc.shape
    d_inner = params["w1"].shape[-1]
    n_qkv = n_head * (2 * d_k + d_v)
    inv_temper = 1.0 / float(np.power(d_model, 0.5))  # LaMP attention temperature

    TB = _pick_batch_block(B, L)
    seq3 = src_seq.reshape(B, 1, L).astype(jnp.int32)
    enc2 = enc.reshape(B * L, D).astype(jnp.float32)   # lane-dense flat activations

    lw = lambda shp: pl.BlockSpec(shp, lambda b, l: (l, 0, 0))  # per-layer weight block

    kernel = functools.partial(_encoder_stack_kernel, n_head=n_head, d_k=d_k,
                               d_v=d_v, inv_temper=inv_temper, eps=1e-3)

    # Re-derived VMEM budget: double-buffered input blocks + output + scratch,
    # capped at 64 MiB so the same tiling also fits a v7x TensorCore.
    est = (2 * (TB * L * 4                         # seq ids
                + TB * L * D * 4                   # embedded input block
                + D * n_qkv * 2                    # wqkv (bf16)
                + n_head * d_v * D * 2             # proj_w (bf16)
                + D * d_inner * 2 + d_inner * D * 2  # w1, w2 (bf16)
                + 8 * D * 4 + d_inner * 4)         # packed vecs, b1
           + 2 * TB * L * D * 4                    # output block
           + TB * L * D * 4)                       # activation scratch
    vmem_limit = int(min(max(2 * est, 32 * 1024 * 1024), 64 * 1024 * 1024))

    out_flat = pl.pallas_call(
        kernel,
        out_shape=jax.ShapeDtypeStruct((B * L, D), jnp.float32),
        grid_spec=pltpu.PrefetchScalarGridSpec(
            num_scalar_prefetch=0,
            grid=(B // TB, n_layers),
            in_specs=[
                pl.BlockSpec((TB, 1, L), lambda b, l: (b, 0, 0)),       # src_seq rows
                pl.BlockSpec((TB * L, D), lambda b, l: (b, 0)),         # embedded input
                lw((1, D, n_qkv)),                                      # fused Wq|Wk|Wv (bf16)
                lw((1, n_head * d_v, D)),                               # proj_w (bf16)
                lw((1, D, d_inner)),                                    # w1 (bf16)
                lw((1, d_inner, D)),                                    # w2 (bf16)
                lw((1, 8, D)),                                          # packed bias/LN vecs
                lw((1, 1, d_inner)),                                    # b1
            ],
            out_specs=pl.BlockSpec((TB * L, D), lambda b, l: (b, 0)),
            scratch_shapes=[pltpu.VMEM((TB * L, D), jnp.float32)],      # running activation
        ),
        compiler_params=pltpu.CompilerParams(
            # batch axis shards across TensorCores (v7x); layer axis is sequential
            dimension_semantics=("parallel", "arbitrary"),
            vmem_limit_bytes=vmem_limit,
        ),
    )(seq3, enc2,
      params["wqkv"], params["proj_w"], params["w1"], params["w2"],
      params["vecs"], params["b1"])
    return out_flat.reshape(B, L, D)


# ------------------------- parameters (synthetic) --------------------------

def position_encoding_init(n_position, d_pos_vec):
    # utils.position_encoding_init (sinusoidal, row 0 == PAD row of zeros)
    pe = np.array(
        [[pos / np.power(10000, 2 * (j // 2) / d_pos_vec) for j in range(d_pos_vec)]
         if pos != 0 else np.zeros(d_pos_vec) for pos in range(n_position)])
    pe[1:, 0::2] = np.sin(pe[1:, 0::2])
    pe[1:, 1::2] = np.cos(pe[1:, 1::2])
    return jnp.asarray(pe, dtype=jnp.float32)


def init_params(key, n_src_vocab, n_max_seq, n_layers, n_head, d_k, d_v,
                d_word_vec, d_model, d_inner_hid):
    keys = iter(jax.random.split(key, 1 + 6 * n_layers))
    word_emb = jax.random.normal(next(keys), (n_src_vocab, d_word_vec), jnp.float32) * 0.1
    word_emb = word_emb.at[PAD].set(0.0)  # padding_idx=PAD
    pos_emb = position_encoding_init(n_max_seq + 1, d_word_vec)

    wqkv_l, pw_l, w1_l, w2_l = [], [], [], []
    for _ in range(n_layers):
        wq = jax.random.normal(next(keys), (n_head, d_model, d_k)) / np.sqrt(d_model)
        wk = jax.random.normal(next(keys), (n_head, d_model, d_k)) / np.sqrt(d_model)
        wv = jax.random.normal(next(keys), (n_head, d_model, d_v)) / np.sqrt(d_model)
        proj_w = jax.random.normal(next(keys), (n_head * d_v, d_model)) / np.sqrt(n_head * d_v)
        w1 = jax.random.normal(next(keys), (d_model, d_inner_hid)) / np.sqrt(d_model)
        w2 = jax.random.normal(next(keys), (d_inner_hid, d_model)) / np.sqrt(d_inner_hid)
        # fold per-head (H, D, d) bmm params into (D, H*d) and concatenate Q|K|V
        fold = lambda w, d: jnp.transpose(w, (1, 0, 2)).reshape(d_model, n_head * d)
        wqkv_l.append(jnp.concatenate(
            [fold(wq, d_k), fold(wk, d_k), fold(wv, d_v)], axis=1))
        pw_l.append(proj_w)
        w1_l.append(w1)
        w2_l.append(w2)

    # packed per-layer (8, D) vector block: rows = [proj_b, ln1_g, ln1_b, b2, ln2_g, ln2_b, 0, 0]
    vecs = np.zeros((n_layers, 8, d_model), np.float32)
    vecs[:, 1, :] = 1.0   # ln1 gamma
    vecs[:, 4, :] = 1.0   # ln2 gamma

    return dict(
        word_emb=word_emb, pos_emb=pos_emb,
        # weights stored bf16 (halves HBM traffic + weight VMEM); acc stays f32
        wqkv=jnp.stack(wqkv_l).astype(jnp.bfloat16),          # (Lyr, D, H*(2dk+dv))
        proj_w=jnp.stack(pw_l).astype(jnp.bfloat16),          # (Lyr, H*dv, D)
        w1=jnp.stack(w1_l).astype(jnp.bfloat16),              # (Lyr, D, d_inner)
        w2=jnp.stack(w2_l).astype(jnp.bfloat16),              # (Lyr, d_inner, D)
        vecs=jnp.asarray(vecs),                               # (Lyr, 8, D) f32
        b1=jnp.zeros((n_layers, 1, d_inner_hid), jnp.float32),
    )


# ------------------------------ forward pass -------------------------------

def graph_encoder_forward(params, src_seq, src_pos, *, n_layers, n_head, d_k, d_v, d_model):
    # embedding lookups (gather) kept as JAX glue
    # TODO(synk): the two gathers + add could be folded into the kernel (scalar-
    #             prefetched row indices gathered at layer==0) to save one HBM pass.
    enc = jnp.take(params["word_emb"], src_seq, axis=0)
    enc = enc + jnp.take(params["pos_emb"], src_pos, axis=0)
    # utils.get_attn_padding_mask is built INSIDE the kernel from src_seq rows.
    # TODO(synk): adj-based in-place mask overwrite (variable-size python list of
    #             adjacency matrices) is data-dependent glue; adj=None path implemented.
    # TODO(synk): onehot=True Conv1d/max_pool1d branch and enc_transform pooling variants
    #             not implemented (defaults onehot=False, enc_transform='').  Dropout =
    #             eval-mode identity.
    out = encoder_stack(params, enc, src_seq, n_layers=n_layers, n_head=n_head,
                        d_k=d_k, d_v=d_v, d_model=d_model)
    return out, None  # (enc_output, None), matching return_attns=False


# ---------------------------------- main -----------------------------------

if __name__ == "__main__":
    # small shapes consistent with the module
    n_src_vocab, n_max_seq = 20, 8
    n_layers, n_head, d_k, d_v = 2, 4, 8, 8
    d_word_vec = d_model = 32
    d_inner_hid = 64
    B, L = 2, n_max_seq

    key = jax.random.PRNGKey(0)
    pkey, skey = jax.random.split(key)
    params = init_params(pkey, n_src_vocab, n_max_seq, n_layers, n_head,
                         d_k, d_v, d_word_vec, d_model, d_inner_hid)

    src_seq = jax.random.randint(skey, (B, L), 1, n_src_vocab, dtype=jnp.int32)
    src_seq = src_seq.at[1, -2:].set(PAD)  # a couple of padding tokens
    positions = jnp.broadcast_to(jnp.arange(1, L + 1, dtype=jnp.int32)[None, :], (B, L))
    src_pos = jnp.where(src_seq != PAD, positions, PAD)

    fwd = jax.jit(functools.partial(graph_encoder_forward, n_layers=n_layers,
                                    n_head=n_head, d_k=d_k, d_v=d_v, d_model=d_model))
    enc_output, _ = fwd(params, src_seq, src_pos)
    jax.block_until_ready(enc_output)

    assert enc_output.shape == (B, L, d_model), enc_output.shape
    assert bool(jnp.all(jnp.isfinite(enc_output)))
    print("KERNEL_OK")
</pallas_src>

<mosaic_0001>
module attributes {stable_mosaic.version = 11 : i64} {
  func.func @_encoder_stack_kernel(%arg0: i32, %arg1: i32, %arg2: memref<2x1x8xi32, #tpu.memory_space<vmem>>, %arg3: memref<16x32xf32, #tpu.memory_space<vmem>>, %arg4: memref<1x32x96xbf16, #tpu.memory_space<vmem>>, %arg5: memref<1x32x32xbf16, #tpu.memory_space<vmem>>, %arg6: memref<1x32x64xbf16, #tpu.memory_space<vmem>>, %arg7: memref<1x64x32xbf16, #tpu.memory_space<vmem>>, %arg8: memref<1x8x32xf32, #tpu.memory_space<vmem>>, %arg9: memref<1x1x64xf32, #tpu.memory_space<vmem>>, %arg10: memref<16x32xf32, #tpu.memory_space<vmem>>, %arg11: memref<16x32xf32, #tpu.memory_space<vmem>>) attributes {dimension_semantics = [#tpu.dimension_semantics<parallel>, #tpu.dimension_semantics<arbitrary>], iteration_bounds = array<i64: 1, 2>, scalar_prefetch = 0 : i64, scratch_operands = 1 : i64, tpu.core_type = #tpu.core_type<tc>, window_params = [{transform_indices = @transform_0, window_bounds = array<i64: 2, 1, 8>}, {transform_indices = @transform_1, window_bounds = array<i64: 16, 32>}, {transform_indices = @transform_2, window_bounds = array<i64: 1, 32, 96>}, {transform_indices = @transform_3, window_bounds = array<i64: 1, 32, 32>}, {transform_indices = @transform_4, window_bounds = array<i64: 1, 32, 64>}, {transform_indices = @transform_5, window_bounds = array<i64: 1, 64, 32>}, {transform_indices = @transform_6, window_bounds = array<i64: 1, 8, 32>}, {transform_indices = @transform_7, window_bounds = array<i64: 1, 1, 64>}, {transform_indices = @transform_8, window_bounds = array<i64: 16, 32>}]} {
    %c0_i32 = arith.constant 0 : i32
    %0 = arith.cmpi eq, %arg1, %c0_i32 : i32
    %1 = arith.extui %0 : i1 to i32
    %c0_i32_0 = arith.constant 0 : i32
    %2 = arith.cmpi ne, %1, %c0_i32_0 : i32
    scf.if %2 {
      %c0_65 = arith.constant 0 : index
      %c0_66 = arith.constant 0 : index
      %200 = vector.load %arg3[%c0_65, %c0_66] : memref<16x32xf32, #tpu.memory_space<vmem>>, vector<16x32xf32>
      %c0_67 = arith.constant 0 : index
      %c0_68 = arith.constant 0 : index
      %201 = vector.load %arg11[%c0_67, %c0_68] : memref<16x32xf32, #tpu.memory_space<vmem>>, vector<16x32xf32>
      tpu.vector_store %arg11[%c0_67, %c0_68], %200 {strides = array<i32>} : memref<16x32xf32, #tpu.memory_space<vmem>>, vector<16x32xf32>,
    } else {
    }
    %c0 = arith.constant 0 : index
    %c0_1 = arith.constant 0 : index
    %3 = vector.load %arg11[%c0, %c0_1] : memref<16x32xf32, #tpu.memory_space<vmem>>, vector<16x32xf32>
    %c0_2 = arith.constant 0 : index
    %c0_3 = arith.constant 0 : index
    %c0_4 = arith.constant 0 : index
    %4 = vector.load %arg2[%c0_2, %c0_3, %c0_4] : memref<2x1x8xi32, #tpu.memory_space<vmem>>, vector<2x1x8xi32>
    %c0_i32_5 = arith.constant 0 : i32
    %5 = vector.broadcast %c0_i32_5 : i32 to vector<2x1x8xi32>
    %6 = arith.cmpi eq, %4, %5 : vector<2x1x8xi32>
    %c0_6 = arith.constant 0 : index
    %c0_7 = arith.constant 0 : index
    %c0_8 = arith.constant 0 : index
    %7 = vector.load %arg8[%c0_6, %c0_7, %c0_8] : memref<1x8x32xf32, #tpu.memory_space<vmem>>, vector<1x8x32xf32>
    %8 = vector.shape_cast %7 : vector<1x8x32xf32> to vector<8x32xf32>
    %9 = vector.extract_strided_slice %8 {offsets = [0, 0], sizes = [1, 32], strides = [1, 1]} : vector<8x32xf32> to vector<1x32xf32>
    %10 = vector.extract_strided_slice %8 {offsets = [1, 0], sizes = [1, 32], strides = [1, 1]} : vector<8x32xf32> to vector<1x32xf32>
    %11 = vector.extract_strided_slice %8 {offsets = [2, 0], sizes = [1, 32], strides = [1, 1]} : vector<8x32xf32> to vector<1x32xf32>
    %12 = vector.extract_strided_slice %8 {offsets = [3, 0], sizes = [1, 32], strides = [1, 1]} : vector<8x32xf32> to vector<1x32xf32>
    %13 = vector.extract_strided_slice %8 {offsets = [4, 0], sizes = [1, 32], strides = [1, 1]} : vector<8x32xf32> to vector<1x32xf32>
    %14 = vector.extract_strided_slice %8 {offsets = [5, 0], sizes = [1, 32], strides = [1, 1]} : vector<8x32xf32> to vector<1x32xf32>
    %15 = arith.truncf %3 : vector<16x32xf32> to vector<16x32xbf16>
    %c0_9 = arith.constant 0 : index
    %c0_10 = arith.constant 0 : index
    %c0_11 = arith.constant 0 : index
    %16 = vector.load %arg4[%c0_9, %c0_10, %c0_11] : memref<1x32x96xbf16, #tpu.memory_space<vmem>>, vector<1x32x96xbf16>
    %17 = vector.shape_cast %16 : vector<1x32x96xbf16> to vector<32x96xbf16>
    %cst = arith.constant dense<0.000000e+00> : vector<16x96xf32>
    %18 = tpu.matmul %15, %17, %cst {dimension_numbers = #tpu.dot_dimension_numbers<[1], [0], [0], [1], [0, 0, 1, 1], [], []>} : vector<16x32xbf16>, vector<32x96xbf16>, vector<16x96xf32> -> vector<16x96xf32>
    %19 = vector.extract_strided_slice %18 {offsets = [0, 0], sizes = [16, 32], strides = [1, 1]} : vector<16x96xf32> to vector<16x32xf32>
    %20 = arith.truncf %19 : vector<16x32xf32> to vector<16x32xbf16>
    %21 = vector.extract_strided_slice %18 {offsets = [0, 32], sizes = [16, 32], strides = [1, 1]} : vector<16x96xf32> to vector<16x32xf32>
    %22 = arith.truncf %21 : vector<16x32xf32> to vector<16x32xbf16>
    %23 = vector.extract_strided_slice %18 {offsets = [0, 64], sizes = [16, 32], strides = [1, 1]} : vector<16x96xf32> to vector<16x32xf32>
    %24 = arith.truncf %23 : vector<16x32xf32> to vector<16x32xbf16>
    %25 = vector.extract_strided_slice %20 {offsets = [0, 0], sizes = [16, 8], strides = [1, 1]} : vector<16x32xbf16> to vector<16x8xbf16>
    %26 = vector.shape_cast %25 : vector<16x8xbf16> to vector<2x8x8xbf16>
    %27 = vector.extract_strided_slice %22 {offsets = [0, 0], sizes = [16, 8], strides = [1, 1]} : vector<16x32xbf16> to vector<16x8xbf16>
    %28 = vector.shape_cast %27 : vector<16x8xbf16> to vector<2x8x8xbf16>
    %29 = vector.extract_strided_slice %24 {offsets = [0, 0], sizes = [16, 8], strides = [1, 1]} : vector<16x32xbf16> to vector<16x8xbf16>
    %30 = vector.shape_cast %29 : vector<16x8xbf16> to vector<2x8x8xbf16>
    "tpu.trace_start"() <{level = 10 : i32, message = "bqd,bkd->bqk"}> : () -> ()
    %cst_12 = arith.constant dense<0.000000e+00> : vector<2x8x8xf32>
    %31 = tpu.matmul %26, %28, %cst_12 {dimension_numbers = #tpu.dot_dimension_numbers<[2], [2], [1], [1], [0, 0, 0, 1, 1, 1], [0], [0]>} : vector<2x8x8xbf16>, vector<2x8x8xbf16>, vector<2x8x8xf32> -> vector<2x8x8xf32>
    "tpu.trace_stop"() : () -> ()
    %cst_13 = arith.constant 0.176776692 : f32
    %32 = vector.broadcast %cst_13 : f32 to vector<2x8x8xf32>
    %33 = arith.mulf %31, %32 : vector<2x8x8xf32>
    %cst_14 = arith.constant -1.000000e+09 : f32
    %34 = vector.shape_cast %6 : vector<2x1x8xi1> to vector<2x1x8xi1>
    %35 = vector.broadcast %34 : vector<2x1x8xi1> to vector<2x8x8xi1>
    %36 = vector.broadcast %cst_14 : f32 to vector<2x8x8xf32>
    %37 = arith.select %35, %36, %33 : vector<2x8x8xi1>, vector<2x8x8xf32>
    %cst_15 = arith.constant dense<0xFF800000> : vector<2x8xf32>
    %38 = vector.multi_reduction <maximumf>, %37, %cst_15 [2] : vector<2x8x8xf32> to vector<2x8xf32>
    %39 = vector.shape_cast %38 : vector<2x8xf32> to vector<2x8x1xf32>
    %40 = vector.broadcast %39 : vector<2x8x1xf32> to vector<2x8x8xf32>
    %41 = arith.subf %37, %40 : vector<2x8x8xf32>
    %42 = math.exp %41 : vector<2x8x8xf32>
    %cst_16 = arith.constant dense<0.000000e+00> : vector<2x8xf32>
    %43 = vector.multi_reduction <add>, %42, %cst_16 [2] : vector<2x8x8xf32> to vector<2x8xf32>
    %44 = vector.shape_cast %43 : vector<2x8xf32> to vector<2x8x1xf32>
    %45 = tpu.reciprocal %44 {approx = true} : vector<2x8x1xf32> -> vector<2x8x1xf32>
    %46 = vector.broadcast %45 : vector<2x8x1xf32> to vector<2x8x8xf32>
    %47 = arith.mulf %42, %46 : vector<2x8x8xf32>
    %48 = arith.truncf %47 : vector<2x8x8xf32> to vector<2x8x8xbf16>
    "tpu.trace_start"() <{level = 10 : i32, message = "bqk,bkd->bqd"}> : () -> ()
    %cst_17 = arith.constant dense<0.000000e+00> : vector<2x8x8xf32>
    %49 = tpu.matmul %48, %30, %cst_17 {dimension_numbers = #tpu.dot_dimension_numbers<[2], [1], [1], [2], [0, 0, 0, 1, 1, 2], [0], [0]>} : vector<2x8x8xbf16>, vector<2x8x8xbf16>, vector<2x8x8xf32> -> vector<2x8x8xf32>
    "tpu.trace_stop"() : () -> ()
    %50 = vector.shape_cast %49 : vector<2x8x8xf32> to vector<16x8xf32>
    %51 = vector.extract_strided_slice %20 {offsets = [0, 8], sizes = [16, 8], strides = [1, 1]} : vector<16x32xbf16> to vector<16x8xbf16>
    %52 = vector.shape_cast %51 : vector<16x8xbf16> to vector<2x8x8xbf16>
    %53 = vector.extract_strided_slice %22 {offsets = [0, 8], sizes = [16, 8], strides = [1, 1]} : vector<16x32xbf16> to vector<16x8xbf16>
    %54 = vector.shape_cast %53 : vector<16x8xbf16> to vector<2x8x8xbf16>
    %55 = vector.extract_strided_slice %24 {offsets = [0, 8], sizes = [16, 8], strides = [1, 1]} : vector<16x32xbf16> to vector<16x8xbf16>
    %56 = vector.shape_cast %55 : vector<16x8xbf16> to vector<2x8x8xbf16>
    "tpu.trace_start"() <{level = 10 : i32, message = "bqd,bkd->bqk"}> : () -> ()
    %cst_18 = arith.constant dense<0.000000e+00> : vector<2x8x8xf32>
    %57 = tpu.matmul %52, %54, %cst_18 {dimension_numbers = #tpu.dot_dimension_numbers<[2], [2], [1], [1], [0, 0, 0, 1, 1, 1], [0], [0]>} : vector<2x8x8xbf16>, vector<2x8x8xbf16>, vector<2x8x8xf32> -> vector<2x8x8xf32>
    "tpu.trace_stop"() : () -> ()
    %cst_19 = arith.constant 0.176776692 : f32
    %58 = vector.broadcast %cst_19 : f32 to vector<2x8x8xf32>
    %59 = arith.mulf %57, %58 : vector<2x8x8xf32>
    %cst_20 = arith.constant -1.000000e+09 : f32
    %60 = vector.shape_cast %6 : vector<2x1x8xi1> to vector<2x1x8xi1>
    %61 = vector.broadcast %60 : vector<2x1x8xi1> to vector<2x8x8xi1>
    %62 = vector.broadcast %cst_20 : f32 to vector<2x8x8xf32>
    %63 = arith.select %61, %62, %59 : vector<2x8x8xi1>, vector<2x8x8xf32>
    %cst_21 = arith.constant dense<0xFF800000> : vector<2x8xf32>
    %64 = vector.multi_reduction <maximumf>, %63, %cst_21 [2] : vector<2x8x8xf32> to vector<2x8xf32>
    %65 = vector.shape_cast %64 : vector<2x8xf32> to vector<2x8x1xf32>
    %66 = vector.broadcast %65 : vector<2x8x1xf32> to vector<2x8x8xf32>
    %67 = arith.subf %63, %66 : vector<2x8x8xf32>
    %68 = math.exp %67 : vector<2x8x8xf32>
    %cst_22 = arith.constant dense<0.000000e+00> : vector<2x8xf32>
    %69 = vector.multi_reduction <add>, %68, %cst_22 [2] : vector<2x8x8xf32> to vector<2x8xf32>
    %70 = vector.shape_cast %69 : vector<2x8xf32> to vector<2x8x1xf32>
    %71 = tpu.reciprocal %70 {approx = true} : vector<2x8x1xf32> -> vector<2x8x1xf32>
    %72 = vector.broadcast %71 : vector<2x8x1xf32> to vector<2x8x8xf32>
    %73 = arith.mulf %68, %72 : vector<2x8x8xf32>
    %74 = arith.truncf %73 : vector<2x8x8xf32> to vector<2x8x8xbf16>
    "tpu.trace_start"() <{level = 10 : i32, message = "bqk,bkd->bqd"}> : () -> ()
    %cst_23 = arith.constant dense<0.000000e+00> : vector<2x8x8xf32>
    %75 = tpu.matmul %74, %56, %cst_23 {dimension_numbers = #tpu.dot_dimension_numbers<[2], [1], [1], [2], [0, 0, 0, 1, 1, 2], [0], [0]>} : vector<2x8x8xbf16>, vector<2x8x8xbf16>, vector<2x8x8xf32> -> vector<2x8x8xf32>
    "tpu.trace_stop"() : () -> ()
    %76 = vector.shape_cast %75 : vector<2x8x8xf32> to vector<16x8xf32>
    %77 = vector.extract_strided_slice %20 {offsets = [0, 16], sizes = [16, 8], strides = [1, 1]} : vector<16x32xbf16> to vector<16x8xbf16>
    %78 = vector.shape_cast %77 : vector<16x8xbf16> to vector<2x8x8xbf16>
    %79 = vector.extract_strided_slice %22 {offsets = [0, 16], sizes = [16, 8], strides = [1, 1]} : vector<16x32xbf16> to vector<16x8xbf16>
    %80 = vector.shape_cast %79 : vector<16x8xbf16> to vector<2x8x8xbf16>
    %81 = vector.extract_strided_slice %24 {offsets = [0, 16], sizes = [16, 8], strides = [1, 1]} : vector<16x32xbf16> to vector<16x8xbf16>
    %82 = vector.shape_cast %81 : vector<16x8xbf16> to vector<2x8x8xbf16>
    "tpu.trace_start"() <{level = 10 : i32, message = "bqd,bkd->bqk"}> : () -> ()
    %cst_24 = arith.constant dense<0.000000e+00> : vector<2x8x8xf32>
    %83 = tpu.matmul %78, %80, %cst_24 {dimension_numbers = #tpu.dot_dimension_numbers<[2], [2], [1], [1], [0, 0, 0, 1, 1, 1], [0], [0]>} : vector<2x8x8xbf16>, vector<2x8x8xbf16>, vector<2x8x8xf32> -> vector<2x8x8xf32>
    "tpu.trace_stop"() : () -> ()
    %cst_25 = arith.constant 0.176776692 : f32
    %84 = vector.broadcast %cst_25 : f32 to vector<2x8x8xf32>
    %85 = arith.mulf %83, %84 : vector<2x8x8xf32>
    %cst_26 = arith.constant -1.000000e+09 : f32
    %86 = vector.shape_cast %6 : vector<2x1x8xi1> to vector<2x1x8xi1>
    %87 = vector.broadcast %86 : vector<2x1x8xi1> to vector<2x8x8xi1>
    %88 = vector.broadcast %cst_26 : f32 to vector<2x8x8xf32>
    %89 = arith.select %87, %88, %85 : vector<2x8x8xi1>, vector<2x8x8xf32>
    %cst_27 = arith.constant dense<0xFF800000> : vector<2x8xf32>
    %90 = vector.multi_reduction <maximumf>, %89, %cst_27 [2] : vector<2x8x8xf32> to vector<2x8xf32>
    %91 = vector.shape_cast %90 : vector<2x8xf32> to vector<2x8x1xf32>
    %92 = vector.broadcast %91 : vector<2x8x1xf32> to vector<2x8x8xf32>
    %93 = arith.subf %89, %92 : vector<2x8x8xf32>
    %94 = math.exp %93 : vector<2x8x8xf32>
    %cst_28 = arith.constant dense<0.000000e+00> : vector<2x8xf32>
    %95 = vector.multi_reduction <add>, %94, %cst_28 [2] : vector<2x8x8xf32> to vector<2x8xf32>
    %96 = vector.shape_cast %95 : vector<2x8xf32> to vector<2x8x1xf32>
    %97 = tpu.reciprocal %96 {approx = true} : vector<2x8x1xf32> -> vector<2x8x1xf32>
    %98 = vector.broadcast %97 : vector<2x8x1xf32> to vector<2x8x8xf32>
    %99 = arith.mulf %94, %98 : vector<2x8x8xf32>
    %100 = arith.truncf %99 : vector<2x8x8xf32> to vector<2x8x8xbf16>
    "tpu.trace_start"() <{level = 10 : i32, message = "bqk,bkd->bqd"}> : () -> ()
    %cst_29 = arith.constant dense<0.000000e+00> : vector<2x8x8xf32>
    %101 = tpu.matmul %100, %82, %cst_29 {dimension_numbers = #tpu.dot_dimension_numbers<[2], [1], [1], [2], [0, 0, 0, 1, 1, 2], [0], [0]>} : vector<2x8x8xbf16>, vector<2x8x8xbf16>, vector<2x8x8xf32> -> vector<2x8x8xf32>
    "tpu.trace_stop"() : () -> ()
    %102 = vector.shape_cast %101 : vector<2x8x8xf32> to vector<16x8xf32>
    %103 = vector.extract_strided_slice %20 {offsets = [0, 24], sizes = [16, 8], strides = [1, 1]} : vector<16x32xbf16> to vector<16x8xbf16>
    %104 = vector.shape_cast %103 : vector<16x8xbf16> to vector<2x8x8xbf16>
    %105 = vector.extract_strided_slice %22 {offsets = [0, 24], sizes = [16, 8], strides = [1, 1]} : vector<16x32xbf16> to vector<16x8xbf16>
    %106 = vector.shape_cast %105 : vector<16x8xbf16> to vector<2x8x8xbf16>
    %107 = vector.extract_strided_slice %24 {offsets = [0, 24], sizes = [16, 8], strides = [1, 1]} : vector<16x32xbf16> to vector<16x8xbf16>
    %108 = vector.shape_cast %107 : vector<16x8xbf16> to vector<2x8x8xbf16>
    "tpu.trace_start"() <{level = 10 : i32, message = "bqd,bkd->bqk"}> : () -> ()
    %cst_30 = arith.constant dense<0.000000e+00> : vector<2x8x8xf32>
    %109 = tpu.matmul %104, %106, %cst_30 {dimension_numbers = #tpu.dot_dimension_numbers<[2], [2], [1], [1], [0, 0, 0, 1, 1, 1], [0], [0]>} : vector<2x8x8xbf16>, vector<2x8x8xbf16>, vector<2x8x8xf32> -> vector<2x8x8xf32>
    "tpu.trace_stop"() : () -> ()
    %cst_31 = arith.constant 0.176776692 : f32
    %110 = vector.broadcast %cst_31 : f32 to vector<2x8x8xf32>
    %111 = arith.mulf %109, %110 : vector<2x8x8xf32>
    %cst_32 = arith.constant -1.000000e+09 : f32
    %112 = vector.shape_cast %6 : vector<2x1x8xi1> to vector<2x1x8xi1>
    %113 = vector.broadcast %112 : vector<2x1x8xi1> to vector<2x8x8xi1>
    %114 = vector.broadcast %cst_32 : f32 to vector<2x8x8xf32>
    %115 = arith.select %113, %114, %111 : vector<2x8x8xi1>, vector<2x8x8xf32>
    %cst_33 = arith.constant dense<0xFF800000> : vector<2x8xf32>
    %116 = vector.multi_reduction <maximumf>, %115, %cst_33 [2] : vector<2x8x8xf32> to vector<2x8xf32>
    %117 = vector.shape_cast %116 : vector<2x8xf32> to vector<2x8x1xf32>
    %118 = vector.broadcast %117 : vector<2x8x1xf32> to vector<2x8x8xf32>
    %119 = arith.subf %115, %118 : vector<2x8x8xf32>
    %120 = math.exp %119 : vector<2x8x8xf32>
    %cst_34 = arith.constant dense<0.000000e+00> : vector<2x8xf32>
    %121 = vector.multi_reduction <add>, %120, %cst_34 [2] : vector<2x8x8xf32> to vector<2x8xf32>
    %122 = vector.shape_cast %121 : vector<2x8xf32> to vector<2x8x1xf32>
    %123 = tpu.reciprocal %122 {approx = true} : vector<2x8x1xf32> -> vector<2x8x1xf32>
    %124 = vector.broadcast %123 : vector<2x8x1xf32> to vector<2x8x8xf32>
    %125 = arith.mulf %120, %124 : vector<2x8x8xf32>
    %126 = arith.truncf %125 : vector<2x8x8xf32> to vector<2x8x8xbf16>
    "tpu.trace_start"() <{level = 10 : i32, message = "bqk,bkd->bqd"}> : () -> ()
    %cst_35 = arith.constant dense<0.000000e+00> : vector<2x8x8xf32>
    %127 = tpu.matmul %126, %108, %cst_35 {dimension_numbers = #tpu.dot_dimension_numbers<[2], [1], [1], [2], [0, 0, 0, 1, 1, 2], [0], [0]>} : vector<2x8x8xbf16>, vector<2x8x8xbf16>, vector<2x8x8xf32> -> vector<2x8x8xf32>
    "tpu.trace_stop"() : () -> ()
    %128 = vector.shape_cast %127 : vector<2x8x8xf32> to vector<16x8xf32>
    %129 = tpu.concatenate %50, %76, %102, %128 in 1 : vector<16x8xf32>, vector<16x8xf32>, vector<16x8xf32>, vector<16x8xf32> -> vector<16x32xf32>
    %130 = arith.truncf %129 : vector<16x32xf32> to vector<16x32xbf16>
    %c0_36 = arith.constant 0 : index
    %c0_37 = arith.constant 0 : index
    %c0_38 = arith.constant 0 : index
    %131 = vector.load %arg5[%c0_36, %c0_37, %c0_38] : memref<1x32x32xbf16, #tpu.memory_space<vmem>>, vector<1x32x32xbf16>
    %132 = vector.shape_cast %131 : vector<1x32x32xbf16> to vector<32x32xbf16>
    %cst_39 = arith.constant dense<0.000000e+00> : vector<16x32xf32>
    %133 = tpu.matmul %130, %132, %cst_39 {dimension_numbers = #tpu.dot_dimension_numbers<[1], [0], [0], [1], [0, 0, 1, 1], [], []>} : vector<16x32xbf16>, vector<32x32xbf16>, vector<16x32xf32> -> vector<16x32xf32>
    %134 = vector.broadcast %9 : vector<1x32xf32> to vector<16x32xf32>
    %135 = arith.addf %133, %134 : vector<16x32xf32>
    %136 = arith.addf %135, %3 : vector<16x32xf32>
    %cst_40 = arith.constant dense<0.000000e+00> : vector<16xf32>
    %137 = vector.multi_reduction <add>, %136, %cst_40 [1] : vector<16x32xf32> to vector<16xf32>
    %138 = vector.shape_cast %137 : vector<16xf32> to vector<16x1xf32>
    %cst_41 = arith.constant 3.200000e+01 : f32
    %139 = vector.broadcast %cst_41 : f32 to vector<16x1xf32>
    %140 = arith.divf %138, %139 : vector<16x1xf32>
    %141 = vector.broadcast %140 : vector<16x1xf32> to vector<16x32xf32>
    %142 = arith.subf %136, %141 : vector<16x32xf32>
    %143 = arith.mulf %142, %142 : vector<16x32xf32>
    %cst_42 = arith.constant dense<0.000000e+00> : vector<16xf32>
    %144 = vector.multi_reduction <add>, %143, %cst_42 [1] : vector<16x32xf32> to vector<16xf32>
    %145 = vector.shape_cast %144 : vector<16xf32> to vector<16x1xf32>
    %cst_43 = arith.constant 3.100000e+01 : f32
    %146 = vector.broadcast %cst_43 : f32 to vector<16x1xf32>
    %147 = arith.divf %145, %146 : vector<16x1xf32>
    %148 = math.sqrt %147 : vector<16x1xf32>
    %cst_44 = arith.constant 1.000000e-03 : f32
    %149 = vector.broadcast %cst_44 : f32 to vector<16x1xf32>
    %150 = arith.addf %148, %149 : vector<16x1xf32>
    %151 = tpu.reciprocal %150 {approx = true} : vector<16x1xf32> -> vector<16x1xf32>
    %152 = vector.broadcast %151 : vector<16x1xf32> to vector<16x32xf32>
    %153 = arith.mulf %142, %152 : vector<16x32xf32>
    %154 = vector.broadcast %10 : vector<1x32xf32> to vector<16x32xf32>
    %155 = arith.mulf %153, %154 : vector<16x32xf32>
    %156 = vector.broadcast %11 : vector<1x32xf32> to vector<16x32xf32>
    %157 = arith.addf %155, %156 : vector<16x32xf32>
    %158 = arith.truncf %157 : vector<16x32xf32> to vector<16x32xbf16>
    %c0_45 = arith.constant 0 : index
    %c0_46 = arith.constant 0 : index
    %c0_47 = arith.constant 0 : index
    %159 = vector.load %arg6[%c0_45, %c0_46, %c0_47] : memref<1x32x64xbf16, #tpu.memory_space<vmem>>, vector<1x32x64xbf16>
    %160 = vector.shape_cast %159 : vector<1x32x64xbf16> to vector<32x64xbf16>
    %cst_48 = arith.constant dense<0.000000e+00> : vector<16x64xf32>
    %161 = tpu.matmul %158, %160, %cst_48 {dimension_numbers = #tpu.dot_dimension_numbers<[1], [0], [0], [1], [0, 0, 1, 1], [], []>} : vector<16x32xbf16>, vector<32x64xbf16>, vector<16x64xf32> -> vector<16x64xf32>
    %c0_49 = arith.constant 0 : index
    %c0_50 = arith.constant 0 : index
    %c0_51 = arith.constant 0 : index
    %162 = vector.load %arg9[%c0_49, %c0_50, %c0_51] : memref<1x1x64xf32, #tpu.memory_space<vmem>>, vector<1x1x64xf32>
    %163 = vector.shape_cast %162 : vector<1x1x64xf32> to vector<1x64xf32>
    %164 = vector.broadcast %163 : vector<1x64xf32> to vector<16x64xf32>
    %165 = arith.addf %161, %164 : vector<16x64xf32>
    %cst_52 = arith.constant 0.000000e+00 : f32
    %166 = vector.broadcast %cst_52 : f32 to vector<16x64xf32>
    %167 = arith.maximumf %165, %166 : vector<16x64xf32>
    %168 = arith.truncf %167 : vector<16x64xf32> to vector<16x64xbf16>
    %c0_53 = arith.constant 0 : index
    %c0_54 = arith.constant 0 : index
    %c0_55 = arith.constant 0 : index
    %169 = vector.load %arg7[%c0_53, %c0_54, %c0_55] : memref<1x64x32xbf16, #tpu.memory_space<vmem>>, vector<1x64x32xbf16>
    %170 = vector.shape_cast %169 : vector<1x64x32xbf16> to vector<64x32xbf16>
    %cst_56 = arith.constant dense<0.000000e+00> : vector<16x32xf32>
    %171 = tpu.matmul %168, %170, %cst_56 {dimension_numbers = #tpu.dot_dimension_numbers<[1], [0], [0], [1], [0, 0, 1, 1], [], []>} : vector<16x64xbf16>, vector<64x32xbf16>, vector<16x32xf32> -> vector<16x32xf32>
    %172 = vector.broadcast %12 : vector<1x32xf32> to vector<16x32xf32>
    %173 = arith.addf %171, %172 : vector<16x32xf32>
    %174 = arith.addf %173, %157 : vector<16x32xf32>
    %cst_57 = arith.constant dense<0.000000e+00> : vector<16xf32>
    %175 = vector.multi_reduction <add>, %174, %cst_57 [1] : vector<16x32xf32> to vector<16xf32>
    %176 = vector.shape_cast %175 : vector<16xf32> to vector<16x1xf32>
    %cst_58 = arith.constant 3.200000e+01 : f32
    %177 = vector.broadcast %cst_58 : f32 to vector<16x1xf32>
    %178 = arith.divf %176, %177 : vector<16x1xf32>
    %179 = vector.broadcast %178 : vector<16x1xf32> to vector<16x32xf32>
    %180 = arith.subf %174, %179 : vector<16x32xf32>
    %181 = arith.mulf %180, %180 : vector<16x32xf32>
    %cst_59 = arith.constant dense<0.000000e+00> : vector<16xf32>
    %182 = vector.multi_reduction <add>, %181, %cst_59 [1] : vector<16x32xf32> to vector<16xf32>
    %183 = vector.shape_cast %182 : vector<16xf32> to vector<16x1xf32>
    %cst_60 = arith.constant 3.100000e+01 : f32
    %184 = vector.broadcast %cst_60 : f32 to vector<16x1xf32>
    %185 = arith.divf %183, %184 : vector<16x1xf32>
    %186 = math.sqrt %185 : vector<16x1xf32>
    %cst_61 = arith.constant 1.000000e-03 : f32
    %187 = vector.broadcast %cst_61 : f32 to vector<16x1xf32>
    %188 = arith.addf %186, %187 : vector<16x1xf32>
    %189 = tpu.reciprocal %188 {approx = true} : vector<16x1xf32> -> vector<16x1xf32>
    %190 = vector.broadcast %189 : vector<16x1xf32> to vector<16x32xf32>
    %191 = arith.mulf %180, %190 : vector<16x32xf32>
    %192 = vector.broadcast %13 : vector<1x32xf32> to vector<16x32xf32>
    %193 = arith.mulf %191, %192 : vector<16x32xf32>
    %194 = vector.broadcast %14 : vector<1x32xf32> to vector<16x32xf32>
    %195 = arith.addf %193, %194 : vector<16x32xf32>
    %c0_62 = arith.constant 0 : index
    %c0_63 = arith.constant 0 : index
    %196 = vector.load %arg11[%c0_62, %c0_63] : memref<16x32xf32, #tpu.memory_space<vmem>>, vector<16x32xf32>
    tpu.vector_store %arg11[%c0_62, %c0_63], %195 {strides = array<i32>} : memref<16x32xf32, #tpu.memory_space<vmem>>, vector<16x32xf32>,
    %c1_i32 = arith.constant 1 : i32
    %197 = arith.cmpi eq, %arg1, %c1_i32 : i32
    %198 = arith.extui %197 : i1 to i32
    %c0_i32_64 = arith.constant 0 : i32
    %199 = arith.cmpi ne, %198, %c0_i32_64 : i32
    scf.if %199 {
      %c0_65 = arith.constant 0 : index
      %c0_66 = arith.constant 0 : index
      %200 = vector.load %arg10[%c0_65, %c0_66] : memref<16x32xf32, #tpu.memory_space<vmem>>, vector<16x32xf32>
      tpu.vector_store %arg10[%c0_65, %c0_66], %195 {strides = array<i32>} : memref<16x32xf32, #tpu.memory_space<vmem>>, vector<16x32xf32>,
    } else {
    }
    return
  }
  func.func @transform_0(%arg0: i32, %arg1: i32) -> (i32, i32, i32) {
    %c0_i32 = arith.constant 0 : i32
    %c0_i32_0 = arith.constant 0 : i32
    %c0_i32_1 = arith.constant 0 : i32
    return %arg0, %c0_i32, %c0_i32_0 : i32, i32, i32
  }
  func.func @transform_1(%arg0: i32, %arg1: i32) -> (i32, i32) {
    %c0_i32 = arith.constant 0 : i32
    %c0_i32_0 = arith.constant 0 : i32
    return %arg0, %c0_i32 : i32, i32
  }
  func.func @transform_2(%arg0: i32, %arg1: i32) -> (i32, i32, i32) {
    %c0_i32 = arith.constant 0 : i32
    %c0_i32_0 = arith.constant 0 : i32
    %c0_i32_1 = arith.constant 0 : i32
    return %arg1, %c0_i32, %c0_i32_0 : i32, i32, i32
  }
  func.func @transform_3(%arg0: i32, %arg1: i32) -> (i32, i32, i32) {
    %c0_i32 = arith.constant 0 : i32
    %c0_i32_0 = arith.constant 0 : i32
    %c0_i32_1 = arith.constant 0 : i32
    return %arg1, %c0_i32, %c0_i32_0 : i32, i32, i32
  }
  func.func @transform_4(%arg0: i32, %arg1: i32) -> (i32, i32, i32) {
    %c0_i32 = arith.constant 0 : i32
    %c0_i32_0 = arith.constant 0 : i32
    %c0_i32_1 = arith.constant 0 : i32
    return %arg1, %c0_i32, %c0_i32_0 : i32, i32, i32
  }
  func.func @transform_5(%arg0: i32, %arg1: i32) -> (i32, i32, i32) {
    %c0_i32 = arith.constant 0 : i32
    %c0_i32_0 = arith.constant 0 : i32
    %c0_i32_1 = arith.constant 0 : i32
    return %arg1, %c0_i32, %c0_i32_0 : i32, i32, i32
  }
  func.func @transform_6(%arg0: i32, %arg1: i32) -> (i32, i32, i32) {
    %c0_i32 = arith.constant 0 : i32
    %c0_i32_0 = arith.constant 0 : i32
    %c0_i32_1 = arith.constant 0 : i32
    return %arg1, %c0_i32, %c0_i32_0 : i32, i32, i32
  }
  func.func @transform_7(%arg0: i32, %arg1: i32) -> (i32, i32, i32) {
    %c0_i32 = arith.constant 0 : i32
    %c0_i32_0 = arith.constant 0 : i32
    %c0_i32_1 = arith.constant 0 : i32
    return %arg1, %c0_i32, %c0_i32_0 : i32, i32, i32
  }
  func.func @transform_8(%arg0: i32, %arg1: i32) -> (i32, i32) {
    %c0_i32 = arith.constant 0 : i32
    %c0_i32_0 = arith.constant 0 : i32
    return %arg0, %c0_i32 : i32, i32
  }
}

</mosaic_0001>

<llo_original>
// kernel: graph_encoder_forward.1
$region0: #{graph_encoder_forward.1}
  #allocation0 [shape = 'u32[]', space=smem, size = 0x4, offset = 0x4, fixed_abs, tag = 'smem constant byte address 0x4 - core index']
  #allocation1 [shape = 'u32[144,128]{1,0:T(1,128)}', space=vmem, size = 0x12000, scoped, tag = 'internal scratch']
  #allocation2 [shape = 'f32[16,32]{1,0:T(8,128)}', space=vmem, size = 0x2000, scoped, tag = 'scratch operand']
  %s0 = inlined_call_operand.vmem [shape: s32[2,1,8], index: 0, kind: input, shape index: {}]
  %s1 = inlined_call_operand.vmem [shape: f32[16,32], index: 1, kind: input, shape index: {}]
  %s2 = inlined_call_operand.vmem [shape: bf16[2,32,96], index: 2, kind: input, shape index: {}]
  %s3 = inlined_call_operand.vmem [shape: bf16[2,32,32], index: 3, kind: input, shape index: {}]
  %s4 = inlined_call_operand.vmem [shape: bf16[2,32,64], index: 4, kind: input, shape index: {}]
  %s5 = inlined_call_operand.vmem [shape: bf16[2,64,32], index: 5, kind: input, shape index: {}]
  %s6 = inlined_call_operand.vmem [shape: f32[2,8,32], index: 6, kind: input, shape index: {}]
  %s7 = inlined_call_operand.vmem [shape: f32[2,1,64], index: 7, kind: input, shape index: {}]
  %s8 = inlined_call_operand.hbm [shape: f32[16,32], index: 8, kind: output, shape index: {}]
  %s9 = sld [smem:[#allocation0]]
  $region73: #{graph_encoder_forward.1} parent=0
    _
  %s11 = ssub.s32 1, %s9
  %s12 = scalar_select 0, %s11, %s9
  $region1: #{graph_encoder_forward.1} parent=0
    #allocation3 [shape = 'u8[8192]{0}', space=vmem, size = 0x2000, scoped, tag = 'output window, operand 0, single buffered']
    #allocation4 [shape = 's32[2]{0}', space=sflag, size = 0x8, scoped, tag = 'scoped memory for graph_encoder_forward.1']
    %13 = vsyncpa [#allocation4], 0
    loop: start=0, step=1, limit=4
    $region2: #{graph_encoder_forward.1} parent=1 // loop_pre_header
      _
    $region3: #{graph_encoder_forward.1} parent=1 // loop_header
      %s15 = sphi 0, %s19
      %p16 = scmp.ge.s32.totalorder %s15, 4
      %s22 = sphi 0, %s34
      %s23 = sphi 0, %s30
      %s24 = sphi 0, %s22
      %s25 = sphi 0, %s23
      %s26 = sphi 0, %s24
      %s27 = sphi 0, %s25
      %s37 = sphi 0, %s39
      %s40 = sphi 0, %s37
      %s41 = sphi 0, %s40
      %s57 = sphi 0, %s41
      %s63 = sphi 0, %s65
      %s66 = sphi 0, %s63
      %s67 = sphi 0, %s66
      %s83 = sphi 0, %s67
      %s89 = sphi 0, %s91
      %s92 = sphi 0, %s89
      %s93 = sphi 0, %s92
      %s109 = sphi 0, %s93
      %s115 = sphi 0, %s117
      %s118 = sphi 0, %s115
      %s119 = sphi 0, %s118
      %s135 = sphi 0, %s119
      %s141 = sphi 0, %s143
      %s144 = sphi 0, %s141
      %s145 = sphi 0, %s144
      %s161 = sphi 0, %s145
      %s167 = sphi 0, %s169
      %s170 = sphi 0, %s167
      %s171 = sphi 0, %s170
      %s187 = sphi 0, %s171
      %s193 = sphi 0, %s195
      %s196 = sphi 0, %s193
      %s197 = sphi 0, %s196
      %s213 = sphi 0, %s197
      %s219 = sphi 0, %s221
      %s222 = sphi 0, %s219
      %s223 = sphi 0, %s222
      %s239 = sphi 0, %s223
      %s245 = sphi 0, %s247
      %s248 = sphi 0, %s245
      %s249 = sphi 0, %s248
      %s265 = sphi 0, %s249
    $region4: #{graph_encoder_forward.1} parent=1 // loop_header_branch
      %18 = sbr.rel (%p16) target = $region8
    $region5: #{graph_encoder_forward.1} parent=1 // loop_body
      %s20 = ssub.s32 %s15, 1
      %s21 = ssub.s32 %s15, 2
      %s28 = sadd.s32 1, %s23
      %p29 = scmp.ge.s32.totalorder %s28, 2
      %s30 = scalar_select %p29, 0, %s28
      %s31 = sadd.s32 1, %s22
      %s32 = scalar_select %p29, %s31, %s22
      %p33 = scmp.ge.s32.totalorder %s32, 1
      %s34 = scalar_select %p33, 0, %s32
      %s35 = ssub.s32 %s22, %s34
      %p36 = scmp.eq.s32.totalorder %s35, 0
      %s38 = sadd.s32 %s37, 1
      %s39 = scalar_select %p36, %s37, %s38
      %p42 = pneg %p36
      %p43 = scmp.eq.s32.totalorder %s15, 1
      %p44 = por %p42, %p43
      %p45 = scmp.ne.s32.totalorder %s37, %s40
      %p46 = scmp.eq.s32.totalorder %s15, 0
      %p47 = por %p45, %p46
      %p48 = scmp.ne.s32.totalorder %s37, %s40
      %p49 = scmp.eq.s32.totalorder %s20, 1
      %p50 = por %p48, %p49
      %p51 = scmp.ne.s32.totalorder %s40, %s41
      %p52 = scmp.eq.s32.totalorder %s20, 0
      %p53 = por %p51, %p52
      %p54 = scmp.ne.s32.totalorder %s40, %s41
      %p55 = scmp.eq.s32.totalorder %s21, 1
      %p56 = por %p54, %p55
      %p58 = scmp.ne.s32.totalorder %s41, %s57
      %p59 = scmp.eq.s32.totalorder %s21, 0
      %p60 = por %p58, %p59
      %s61 = ssub.s32 %s22, %s34
      %p62 = scmp.eq.s32.totalorder %s61, 0
      %s64 = sadd.s32 %s63, 1
      %s65 = scalar_select %p62, %s63, %s64
      %p68 = pneg %p62
      %p69 = scmp.eq.s32.totalorder %s15, 1
      %p70 = por %p68, %p69
      %p71 = scmp.ne.s32.totalorder %s63, %s66
      %p72 = scmp.eq.s32.totalorder %s15, 0
      %p73 = por %p71, %p72
      %p74 = scmp.ne.s32.totalorder %s63, %s66
      %p75 = scmp.eq.s32.totalorder %s20, 1
      %p76 = por %p74, %p75
      %p77 = scmp.ne.s32.totalorder %s66, %s67
      %p78 = scmp.eq.s32.totalorder %s20, 0
      %p79 = por %p77, %p78
      %p80 = scmp.ne.s32.totalorder %s66, %s67
      %p81 = scmp.eq.s32.totalorder %s21, 1
      %p82 = por %p80, %p81
      %p84 = scmp.ne.s32.totalorder %s67, %s83
      %p85 = scmp.eq.s32.totalorder %s21, 0
      %p86 = por %p84, %p85
      %s87 = ssub.s32 %s23, %s30
      %p88 = scmp.eq.s32.totalorder %s87, 0
      %s90 = sadd.s32 %s89, 1
      %s91 = scalar_select %p88, %s89, %s90
      %p94 = pneg %p88
      %p95 = scmp.eq.s32.totalorder %s15, 1
      %p96 = por %p94, %p95
      %p97 = scmp.ne.s32.totalorder %s89, %s92
      %p98 = scmp.eq.s32.totalorder %s15, 0
      %p99 = por %p97, %p98
      %p100 = scmp.ne.s32.totalorder %s89, %s92
      %p101 = scmp.eq.s32.totalorder %s20, 1
      %p102 = por %p100, %p101
      %p103 = scmp.ne.s32.totalorder %s92, %s93
      %p104 = scmp.eq.s32.totalorder %s20, 0
      %p105 = por %p103, %p104
      %p106 = scmp.ne.s32.totalorder %s92, %s93
      %p107 = scmp.eq.s32.totalorder %s21, 1
      %p108 = por %p106, %p107
      %p110 = scmp.ne.s32.totalorder %s93, %s109
      %p111 = scmp.eq.s32.totalorder %s21, 0
      %p112 = por %p110, %p111
      %s113 = ssub.s32 %s23, %s30
      %p114 = scmp.eq.s32.totalorder %s113, 0
      %s116 = sadd.s32 %s115, 1
      %s117 = scalar_select %p114, %s115, %s116
      %p120 = pneg %p114
      %p121 = scmp.eq.s32.totalorder %s15, 1
      %p122 = por %p120, %p121
      %p123 = scmp.ne.s32.totalorder %s115, %s118
      %p124 = scmp.eq.s32.totalorder %s15, 0
      %p125 = por %p123, %p124
      %p126 = scmp.ne.s32.totalorder %s115, %s118
      %p127 = scmp.eq.s32.totalorder %s20, 1
      %p128 = por %p126, %p127
      %p129 = scmp.ne.s32.totalorder %s118, %s119
      %p130 = scmp.eq.s32.totalorder %s20, 0
      %p131 = por %p129, %p130
      %p132 = scmp.ne.s32.totalorder %s118, %s119
      %p133 = scmp.eq.s32.totalorder %s21, 1
      %p134 = por %p132, %p133
      %p136 = scmp.ne.s32.totalorder %s119, %s135
      %p137 = scmp.eq.s32.totalorder %s21, 0
      %p138 = por %p136, %p137
      %s139 = ssub.s32 %s23, %s30
      %p140 = scmp.eq.s32.totalorder %s139, 0
      %s142 = sadd.s32 %s141, 1
      %s143 = scalar_select %p140, %s141, %s142
      %p146 = pneg %p140
      %p147 = scmp.eq.s32.totalorder %s15, 1
      %p148 = por %p146, %p147
      %p149 = scmp.ne.s32.totalorder %s141, %s144
      %p150 = scmp.eq.s32.totalorder %s15, 0
      %p151 = por %p149, %p150
      %p152 = scmp.ne.s32.totalorder %s141, %s144
      %p153 = scmp.eq.s32.totalorder %s20, 1
      %p154 = por %p152, %p153
      %p155 = scmp.ne.s32.totalorder %s144, %s145
      %p156 = scmp.eq.s32.totalorder %s20, 0
      %p157 = por %p155, %p156
      %p158 = scmp.ne.s32.totalorder %s144, %s145
      %p159 = scmp.eq.s32.totalorder %s21, 1
      %p160 = por %p158, %p159
      %p162 = scmp.ne.s32.totalorder %s145, %s161
      %p163 = scmp.eq.s32.totalorder %s21, 0
      %p164 = por %p162, %p163
      %s165 = ssub.s32 %s23, %s30
      %p166 = scmp.eq.s32.totalorder %s165, 0
      %s168 = sadd.s32 %s167, 1
      %s169 = scalar_select %p166, %s167, %s168
      %p172 = pneg %p166
      %p173 = scmp.eq.s32.totalorder %s15, 1
      %p174 = por %p172, %p173
      %p175 = scmp.ne.s32.totalorder %s167, %s170
      %p176 = scmp.eq.s32.totalorder %s15, 0
      %p177 = por %p175, %p176
      %p178 = scmp.ne.s32.totalorder %s167, %s170
      %p179 = scmp.eq.s32.totalorder %s20, 1
      %p180 = por %p178, %p179
      %p181 = scmp.ne.s32.totalorder %s170, %s171
      %p182 = scmp.eq.s32.totalorder %s20, 0
      %p183 = por %p181, %p182
      %p184 = scmp.ne.s32.totalorder %s170, %s171
      %p185 = scmp.eq.s32.totalorder %s21, 1
      %p186 = por %p184, %p185
      %p188 = scmp.ne.s32.totalorder %s171, %s187
      %p189 = scmp.eq.s32.totalorder %s21, 0
      %p190 = por %p188, %p189
      %s191 = ssub.s32 %s23, %s30
      %p192 = scmp.eq.s32.totalorder %s191, 0
      %s194 = sadd.s32 %s193, 1
      %s195 = scalar_select %p192, %s193, %s194
      %p198 = pneg %p192
      %p199 = scmp.eq.s32.totalorder %s15, 1
      %p200 = por %p198, %p199
      %p201 = scmp.ne.s32.totalorder %s193, %s196
      %p202 = scmp.eq.s32.totalorder %s15, 0
      %p203 = por %p201, %p202
      %p204 = scmp.ne.s32.totalorder %s193, %s196
      %p205 = scmp.eq.s32.totalorder %s20, 1
      %p206 = por %p204, %p205
      %p207 = scmp.ne.s32.totalorder %s196, %s197
      %p208 = scmp.eq.s32.totalorder %s20, 0
      %p209 = por %p207, %p208
      %p210 = scmp.ne.s32.totalorder %s196, %s197
      %p211 = scmp.eq.s32.totalorder %s21, 1
      %p212 = por %p210, %p211
      %p214 = scmp.ne.s32.totalorder %s197, %s213
      %p215 = scmp.eq.s32.totalorder %s21, 0
      %p216 = por %p214, %p215
      %s217 = ssub.s32 %s23, %s30
      %p218 = scmp.eq.s32.totalorder %s217, 0
      %s220 = sadd.s32 %s219, 1
      %s221 = scalar_select %p218, %s219, %s220
      %p224 = pneg %p218
      %p225 = scmp.eq.s32.totalorder %s15, 1
      %p226 = por %p224, %p225
      %p227 = scmp.ne.s32.totalorder %s219, %s222
      %p228 = scmp.eq.s32.totalorder %s15, 0
      %p229 = por %p227, %p228
      %p230 = scmp.ne.s32.totalorder %s219, %s222
      %p231 = scmp.eq.s32.totalorder %s20, 1
      %p232 = por %p230, %p231
      %p233 = scmp.ne.s32.totalorder %s222, %s223
      %p234 = scmp.eq.s32.totalorder %s20, 0
      %p235 = por %p233, %p234
      %p236 = scmp.ne.s32.totalorder %s222, %s223
      %p237 = scmp.eq.s32.totalorder %s21, 1
      %p238 = por %p236, %p237
      %p240 = scmp.ne.s32.totalorder %s223, %s239
      %p241 = scmp.eq.s32.totalorder %s21, 0
      %p242 = por %p240, %p241
      %s243 = ssub.s32 %s22, %s34
      %p244 = scmp.eq.s32.totalorder %s243, 0
      %s246 = sadd.s32 %s245, 1
      %s247 = scalar_select %p244, %s245, %s246
      %p250 = pneg %p244
      %p251 = scmp.eq.s32.totalorder %s15, 1
      %p252 = por %p250, %p251
      %p253 = scmp.ne.s32.totalorder %s245, %s248
      %p254 = scmp.eq.s32.totalorder %s15, 0
      %p255 = por %p253, %p254
      %p256 = scmp.ne.s32.totalorder %s245, %s248
      %p257 = scmp.eq.s32.totalorder %s20, 1
      %p258 = por %p256, %p257
      %p259 = scmp.ne.s32.totalorder %s248, %s249
      %p260 = scmp.eq.s32.totalorder %s20, 0
      %p261 = por %p259, %p260
      %p262 = scmp.ne.s32.totalorder %s248, %s249
      %p263 = scmp.eq.s32.totalorder %s21, 1
      %p264 = por %p262, %p263
      %p266 = scmp.ne.s32.totalorder %s249, %s265
      %p267 = scmp.eq.s32.totalorder %s21, 0
      %p268 = por %p266, %p267
      %p269 = scmp.le.s32.totalorder 1, %s15
      %p270 = scmp.lt.s32.totalorder %s15, 3
      %p271 = pnand %p269, %p270
      %p272 = pneg %p271
      // Predicated region
      $region9: #{graph_encoder_forward.1} parent=5 // pred_check
        _
      $region10: #{graph_encoder_forward.1} parent=5 // pred_check_branch
        %274 = sbr.rel (%p271) target = $region12
      $region11: #{graph_encoder_forward.1} parent=5 // pred_region
        %s275 = ssub.s32 %s15, 1
        // Predicated region
        $region13: #{graph_encoder_forward.1} parent=11 // pred_check
          %p276 = pneg %p53
        $region14: #{graph_encoder_forward.1} parent=11 // pred_check_branch
          %278 = sbr.rel (%p276) target = $region16
        $region15: #{graph_encoder_forward.1} parent=11 // pred_region
          %s279 = smul.u32 2, %s24
          %p280 = scmp.lt.s32.totalorder %s279, 1
          %s281 = scalar_select %p280, %s279, 1
          %s282 = scalar_lea.vmem %s0, %s281
          %s283 = smul.u32 2, %s24
        $region16: #{graph_encoder_forward.1} parent=11 // pred_fallthru
          _
        // Predicated region
        $region17: #{graph_encoder_forward.1} parent=11 // pred_check
          %p284 = pneg %p79
        $region18: #{graph_encoder_forward.1} parent=11 // pred_check_branch
          %286 = sbr.rel (%p284) target = $region20
        $region19: #{graph_encoder_forward.1} parent=11 // pred_region
          %s287 = smul.u32 2, %s24
          %p288 = scmp.lt.s32.totalorder %s287, 1
          %s289 = scalar_select %p288, %s287, 1
          %s290 = smul.addr %s289, 8
          %s291 = scalar_lea.vmem %s1, %s290
          %s292 = smul.u32 2, %s24
        $region20: #{graph_encoder_forward.1} parent=11 // pred_fallthru
          _
      $region12: #{graph_encoder_forward.1} parent=5 // pred_fallthru
        _
      %p293 = scmp.lt.s32.totalorder %s15, 2
      // Predicated region
      $region21: #{graph_encoder_forward.1} parent=5 // pred_check
        %p294 = pneg %p293
      $region22: #{graph_encoder_forward.1} parent=5 // pred_check_branch
        %296 = sbr.rel (%p294) target = $region24
      $region23: #{graph_encoder_forward.1} parent=5 // pred_region
        // Predicated region
        $region25: #{graph_encoder_forward.1} parent=23 // pred_check
          %p297 = pneg %p99
        $region26: #{graph_encoder_forward.1} parent=23 // pred_check_branch
          %299 = sbr.rel (%p297) target = $region28
        $region27: #{graph_encoder_forward.1} parent=23 // pred_region
          %p300 = scmp.lt.s32.totalorder %s23, 1
          %s301 = scalar_select %p300, %s23, 1
          %s302 = smul.addr %s301, 4
          %s303 = smul.addr %s302, 4
          %s304 = scalar_lea.vmem %s2, %s303
        $region28: #{graph_encoder_forward.1} parent=23 // pred_fallthru
          _
        // Predicated region
        $region29: #{graph_encoder_forward.1} parent=23 // pred_check
          %p305 = pneg %p125
        $region30: #{graph_encoder_forward.1} parent=23 // pred_check_branch
          %307 = sbr.rel (%p305) target = $region32
        $region31: #{graph_encoder_forward.1} parent=23 // pred_region
          %p308 = scmp.lt.s32.totalorder %s23, 1
          %s309 = scalar_select %p308, %s23, 1
          %s310 = smul.addr %s309, 4
          %s311 = smul.addr %s310, 4
          %s312 = scalar_lea.vmem %s3, %s311
        $region32: #{graph_encoder_forward.1} parent=23 // pred_fallthru
          _
        // Predicated region
        $region33: #{graph_encoder_forward.1} parent=23 // pred_check
          %p313 = pneg %p151
        $region34: #{graph_encoder_forward.1} parent=23 // pred_check_branch
          %315 = sbr.rel (%p313) target = $region36
        $region35: #{graph_encoder_forward.1} parent=23 // pred_region
          %p316 = scmp.lt.s32.totalorder %s23, 1
          %s317 = scalar_select %p316, %s23, 1
          %s318 = smul.addr %s317, 4
          %s319 = smul.addr %s318, 4
          %s320 = scalar_lea.vmem %s4, %s319
        $region36: #{graph_encoder_forward.1} parent=23 // pred_fallthru
          _
        // Predicated region
        $region37: #{graph_encoder_forward.1} parent=23 // pred_check
          %p321 = pneg %p177
        $region38: #{graph_encoder_forward.1} parent=23 // pred_check_branch
          %323 = sbr.rel (%p321) target = $region40
        $region39: #{graph_encoder_forward.1} parent=23 // pred_region
          %p324 = scmp.lt.s32.totalorder %s23, 1
          %s325 = scalar_select %p324, %s23, 1
          %s326 = smul.addr %s325, 8
          %s327 = smul.addr %s326, 4
          %s328 = scalar_lea.vmem %s5, %s327
        $region40: #{graph_encoder_forward.1} parent=23 // pred_fallthru
          _
        // Predicated region
        $region41: #{graph_encoder_forward.1} parent=23 // pred_check
          %p329 = pneg %p203
        $region42: #{graph_encoder_forward.1} parent=23 // pred_check_branch
          %331 = sbr.rel (%p329) target = $region44
        $region43: #{graph_encoder_forward.1} parent=23 // pred_region
          %p332 = scmp.lt.s32.totalorder %s23, 1
          %s333 = scalar_select %p332, %s23, 1
          %s334 = smul.addr %s333, 8
          %s335 = scalar_lea.vmem %s6, %s334
        $region44: #{graph_encoder_forward.1} parent=23 // pred_fallthru
          _
        // Predicated region
        $region45: #{graph_encoder_forward.1} parent=23 // pred_check
          %p336 = pneg %p229
        $region46: #{graph_encoder_forward.1} parent=23 // pred_check_branch
          %338 = sbr.rel (%p336) target = $region48
        $region47: #{graph_encoder_forward.1} parent=23 // pred_region
          %p339 = scmp.lt.s32.totalorder %s23, 1
          %s340 = scalar_select %p339, %s23, 1
          %s341 = scalar_lea.vmem %s7, %s340
        $region48: #{graph_encoder_forward.1} parent=23 // pred_fallthru
          _
      $region24: #{graph_encoder_forward.1} parent=5 // pred_fallthru
        _
      %p342 = scmp.le.s32.totalorder 1, %s15
      %p343 = scmp.lt.s32.totalorder %s15, 3
      %p344 = pnand %p342, %p343
      %p345 = pneg %p344
      // Predicated region
      $region49: #{graph_encoder_forward.1} parent=5 // pred_check
        _
      $region50: #{graph_encoder_forward.1} parent=5 // pred_check_branch
        %347 = sbr.rel (%p344) target = $region52
      $region51: #{graph_encoder_forward.1} parent=5 // pred_region
        %s348 = ssub.s32 %s15, 1
        %s349 = smul.u32 2, %s24
        %p350 = scmp.lt.s32.totalorder %s349, 1
        %s351 = scalar_select %p350, %s349, 1
        %s352 = scalar_lea.vmem %s0, %s351
        %p353 = pneg %p53
        %p354 = pneg %p50
        %s355 = smul.u32 2, %s24
        %p356 = scmp.lt.s32.totalorder %s355, 1
        %s357 = scalar_select %p356, %s355, 1
        %s358 = smul.addr %s357, 8
        %s359 = scalar_lea.vmem %s1, %s358
        %p360 = pneg %p79
        %p361 = pneg %p76
        %p362 = scmp.lt.s32.totalorder %s25, 1
        %s363 = scalar_select %p362, %s25, 1
        %s364 = smul.addr %s363, 4
        %s365 = smul.addr %s364, 4
        %s366 = scalar_lea.vmem %s2, %s365
        %p367 = pneg %p105
        %p368 = pneg %p102
        %p369 = scmp.lt.s32.totalorder %s25, 1
        %s370 = scalar_select %p369, %s25, 1
        %s371 = smul.addr %s370, 4
        %s372 = smul.addr %s371, 4
        %s373 = scalar_lea.vmem %s3, %s372
        %p374 = pneg %p131
        %p375 = pneg %p128
        %p376 = scmp.lt.s32.totalorder %s25, 1
        %s377 = scalar_select %p376, %s25, 1
        %s378 = smul.addr %s377, 4
        %s379 = smul.addr %s378, 4
        %s380 = scalar_lea.vmem %s4, %s379
        %p381 = pneg %p157
        %p382 = pneg %p154
        %p383 = scmp.lt.s32.totalorder %s25, 1
        %s384 = scalar_select %p383, %s25, 1
        %s385 = smul.addr %s384, 8
        %s386 = smul.addr %s385, 4
        %s387 = scalar_lea.vmem %s5, %s386
        %p388 = pneg %p183
        %p389 = pneg %p180
        %p390 = scmp.lt.s32.totalorder %s25, 1
        %s391 = scalar_select %p390, %s25, 1
        %s392 = smul.addr %s391, 8
        %s393 = scalar_lea.vmem %s6, %s392
        %p394 = pneg %p209
        %p395 = pneg %p206
        %p396 = scmp.lt.s32.totalorder %s25, 1
        %s397 = scalar_select %p396, %s25, 1
        %s398 = scalar_lea.vmem %s7, %s397
        %p399 = pneg %p235
        %p400 = pneg %p232
        %p401 = pneg %p261
        %p402 = pneg %p258
        %s403 = smul.u32 2, %s24
        %p404 = scmp.lt.s32.totalorder %s403, 1
        %s405 = scalar_select %p404, %s403, 1
        %s406 = scalar_lea.vmem %s0, %s405
        %s407 = smul.u32 2, %s24
        %s408 = smul.u32 2, %s24
        %p409 = scmp.lt.s32.totalorder %s408, 1
        %s410 = scalar_select %p409, %s408, 1
        %s411 = smul.addr %s410, 8
        %s412 = scalar_lea.vmem %s1, %s411
        %s413 = smul.u32 2, %s24
        %p414 = scmp.lt.s32.totalorder %s25, 1
        %s415 = scalar_select %p414, %s25, 1
        %s416 = smul.addr %s415, 4
        %s417 = smul.addr %s416, 4
        %s418 = scalar_lea.vmem %s2, %s417
        %p419 = scmp.lt.s32.totalorder %s25, 1
        %s420 = scalar_select %p419, %s25, 1
        %s421 = smul.addr %s420, 4
        %s422 = smul.addr %s421, 4
        %s423 = scalar_lea.vmem %s3, %s422
        %p424 = scmp.lt.s32.totalorder %s25, 1
        %s425 = scalar_select %p424, %s25, 1
        %s426 = smul.addr %s425, 4
        %s427 = smul.addr %s426, 4
        %s428 = scalar_lea.vmem %s4, %s427
        %p429 = scmp.lt.s32.totalorder %s25, 1
        %s430 = scalar_select %p429, %s25, 1
        %s431 = smul.addr %s430, 8
        %s432 = smul.addr %s431, 4
        %s433 = scalar_lea.vmem %s5, %s432
        %p434 = scmp.lt.s32.totalorder %s25, 1
        %s435 = scalar_select %p434, %s25, 1
        %s436 = smul.addr %s435, 8
        %s437 = scalar_lea.vmem %s6, %s436
        %p438 = scmp.lt.s32.totalorder %s25, 1
        %s439 = scalar_select %p438, %s25, 1
        %s440 = scalar_lea.vmem %s7, %s439
        %s441 = smul.u32 2, %s24
        %p443 = scmp.eq.s32.totalorder %s25, 0
        // Predicated region
        $region53: #{graph_encoder_forward.1} parent=51 // pred_check
          %p444 = pneg %p443
        $region54: #{graph_encoder_forward.1} parent=51 // pred_check_branch
          %446 = sbr.rel (%p444) target = $region56
        $region55: #{graph_encoder_forward.1} parent=51 // pred_region
          %v447 = vld [vmem:[%s412] sm:$0xff]
          %v448 = vld [vmem:[%s412 + $0x8] sm:$0xff]
          %vm449 = vcmask 261120
          %450 = vst.msk [vmem:[#allocation2] sm:$0xff] %vm449, %v447
          %451 = vst.msk [vmem:[#allocation2 + $0x8] sm:$0xff] %vm449, %v448
        $region56: #{graph_encoder_forward.1} parent=51 // pred_fallthru
          _
        %v452 = vld [vmem:[#allocation2] sm:$0xff]
        %v453 = vld [vmem:[#allocation2 + $0x8] sm:$0xff]
        %v454 = vld [vmem:[%s406] sm:$0x1]
        %v455 = vld [vmem:[%s406 + $0x1] sm:$0x1]
        %vm456 = vcmp.eq.s32.totalorder %v454, 0
        %vm457 = vcmp.eq.s32.totalorder %v455, 0
        %v458 = vld [vmem:[%s437] sm:$0xff]
        %v459 = vpack.c.bf16 %v453, %v452
        %v460 = vld [vmem:[%s418] sm:$0xf]
        %v461 = vld [vmem:[%s418 + $0x4] sm:$0xf]
        %v462 = vld [vmem:[%s418 + $0x8] sm:$0xf]
        %v463 = vld [vmem:[%s418 + $0xc] sm:$0xf]
        %v468 = vunpack.c.l.b16 %v460
        %v469 = vunpack.c.l.b16 %v461
        %v470 = vunpack.c.l.b16 %v462
        %v471 = vunpack.c.l.b16 %v463
        %v472 = vpack.c.b16 %v469, %v468
        %v473 = vpack.c.b16 %v471, %v470
        %vm476 = vcmask 261120
        %v478 = vsel %vm476, %v459, 0
        %480 = vmatprep.subr.bf16.mxu0 0
        %481 = vmatpush1.bf16.msra.mxu0 %v472
        %482 = vmatprep.subr.bf16.mxu0 0
        %483 = vmatpush1.bf16.msra.mxu0 %v473
        %484 = vmatprep.subr.bf16.mxu0 0
        %485 = vmatpush1.bf16.msra.mxu0 0
        %486 = vmatprep.subr.bf16.mxu0 0
        %487 = vmatpush1.bf16.msra.mxu0 0
        %488 = vmatprep.subr.bf16.mxu0 0
        %489 = vmatpush1.bf16.msra.mxu0 0
        %490 = vmatprep.subr.bf16.mxu0 0
        %491 = vmatpush1.bf16.msra.mxu0 0
        %492 = vmatprep.subr.bf16.mxu0 0
        %493 = vmatpush1.bf16.msra.mxu0 0
        %494 = vmatprep.subr.bf16.mxu0 0
        %495 = vmatpush1.bf16.msra.mxu0 0
        %496 = vmatprep.subr.bf16.mxu0 0
        %497 = vmatpush1.bf16.msra.mxu0 0
        %498 = vmatprep.subr.bf16.mxu0 0
        %499 = vmatpush1.bf16.msra.mxu0 0
        %500 = vmatprep.subr.bf16.mxu0 0
        %501 = vmatpush1.bf16.msra.mxu0 0
        %502 = vmatprep.subr.bf16.mxu0 0
        %503 = vmatpush1.bf16.msra.mxu0 0
        %504 = vmatprep.subr.bf16.mxu0 0
        %505 = vmatpush1.bf16.msra.mxu0 0
        %506 = vmatprep.subr.bf16.mxu0 0
        %507 = vmatpush1.bf16.msra.mxu0 0
        %508 = vmatprep.subr.bf16.mxu0 0
        %509 = vmatpush1.bf16.msra.mxu0 0
        %510 = vmatprep.subr.bf16.mxu0 0
        %511 = vmatpush1.bf16.msra.mxu0 0
        %512 = vmatprep.mubr.bf16.mxu0 0
        %513 = vmatmul.mubr.bf16.gmra.mrb[0].mxu0 %v478
        %v514 = vpop.f32.mrb[0].mxu0
        %v515 = vadd.f32 0.0, %v514
        %v516 = vpop.f32.mrb[0].mxu0
        %v517 = vpop.f32.mrb[0].mxu0
        %v518 = vadd.f32 0.0, %v517
        %v519 = vpop.f32.mrb[0].mxu0
        %520 = vdwg.mxu0
        %v521 = vpack.c.bf16 %v518, %v515
        %v523 = vunpack.c.l.b16 %v521
        %v524 = vunpack.c.h.b16 %v521
        %v525 = vpack.c.b16 %v523, %v523
        %v526 = vpack.c.b16 %v524, %v524
        %527 = vrot.lane.b32.xlu0 %v525, 96
        %v528 = vpop.permute.xlu0 %527
        %vm529 = vcmask 64512
        %v531 = vsel %vm529, %v525, 0
        %v534 = vsel %vm529, %v528, 0
        %536 = vmatprep.subr.bf16.mxu0 0
        %537 = vmatpush1.bf16.xpose.msra.mxu0 %v534
        %538 = vmatprep.subr.bf16.mxu0 0
        %539 = vmatpush1.bf16.xpose.msra.mxu0 0
        %540 = vmatprep.subr.bf16.mxu0 0
        %541 = vmatpush1.bf16.xpose.msra.mxu0 0
        %542 = vmatprep.subr.bf16.mxu0 0
        %543 = vmatpush1.bf16.xpose.msra.mxu0 0
        %544 = vmatprep.subr.bf16.mxu0 0
        %545 = vmatpush1.bf16.xpose.msra.mxu0 0
        %546 = vmatprep.subr.bf16.mxu0 0
        %547 = vmatpush1.bf16.xpose.msra.mxu0 0
        %548 = vmatprep.subr.bf16.mxu0 0
        %549 = vmatpush1.bf16.xpose.msra.mxu0 0
        %550 = vmatprep.subr.bf16.mxu0 0
        %551 = vmatpush1.bf16.xpose.msra.mxu0 0
        %552 = vmatprep.subr.bf16.mxu0 0
        %553 = vmatpush1.bf16.xpose.msra.mxu0 0
        %554 = vmatprep.subr.bf16.mxu0 0
        %555 = vmatpush1.bf16.xpose.msra.mxu0 0
        %556 = vmatprep.subr.bf16.mxu0 0
        %557 = vmatpush1.bf16.xpose.msra.mxu0 0
        %558 = vmatprep.subr.bf16.mxu0 0
        %559 = vmatpush1.bf16.xpose.msra.mxu0 0
        %560 = vmatprep.subr.bf16.mxu0 0
        %561 = vmatpush1.bf16.xpose.msra.mxu0 0
        %562 = vmatprep.subr.bf16.mxu0 0
        %563 = vmatpush1.bf16.xpose.msra.mxu0 0
        %564 = vmatprep.subr.bf16.mxu0 0
        %565 = vmatpush1.bf16.xpose.msra.mxu0 0
        %566 = vmatprep.subr.bf16.mxu0 0
        %567 = vmatpush1.bf16.xpose.msra.mxu0 0
        %568 = vmatprep.mubr.bf16.mxu0 0
        %569 = vmatmul.mubr.bf16.gmra.mrb[0].mxu0 %v531
        %v570 = vpop.f32.mrb[0].mxu0
        %v571 = vadd.f32 0.0, %v570
        %v572 = vpop.f32.mrb[0].mxu0
        %v573 = vpop.f32.mrb[0].mxu0
        %v574 = vpop.f32.mrb[0].mxu0
        %575 = vdwg.mxu0
        %576 = vrot.lane.b32.xlu0 %v526, 96
        %v577 = vpop.permute.xlu0 %576
        %v579 = vsel %vm529, %v526, 0
        %v582 = vsel %vm529, %v577, 0
        %584 = vmatprep.subr.bf16.mxu0 0
        %585 = vmatpush1.bf16.xpose.msra.mxu0 %v582
        %586 = vmatprep.subr.bf16.mxu0 0
        %587 = vmatpush1.bf16.xpose.msra.mxu0 0
        %588 = vmatprep.subr.bf16.mxu0 0
        %589 = vmatpush1.bf16.xpose.msra.mxu0 0
        %590 = vmatprep.subr.bf16.mxu0 0
        %591 = vmatpush1.bf16.xpose.msra.mxu0 0
        %592 = vmatprep.subr.bf16.mxu0 0
        %593 = vmatpush1.bf16.xpose.msra.mxu0 0
        %594 = vmatprep.subr.bf16.mxu0 0
        %595 = vmatpush1.bf16.xpose.msra.mxu0 0
        %596 = vmatprep.subr.bf16.mxu0 0
        %597 = vmatpush1.bf16.xpose.msra.mxu0 0
        %598 = vmatprep.subr.bf16.mxu0 0
        %599 = vmatpush1.bf16.xpose.msra.mxu0 0
        %600 = vmatprep.subr.bf16.mxu0 0
        %601 = vmatpush1.bf16.xpose.msra.mxu0 0
        %602 = vmatprep.subr.bf16.mxu0 0
        %603 = vmatpush1.bf16.xpose.msra.mxu0 0
        %604 = vmatprep.subr.bf16.mxu0 0
        %605 = vmatpush1.bf16.xpose.msra.mxu0 0
        %606 = vmatprep.subr.bf16.mxu0 0
        %607 = vmatpush1.bf16.xpose.msra.mxu0 0
        %608 = vmatprep.subr.bf16.mxu0 0
        %609 = vmatpush1.bf16.xpose.msra.mxu0 0
        %610 = vmatprep.subr.bf16.mxu0 0
        %611 = vmatpush1.bf16.xpose.msra.mxu0 0
        %612 = vmatprep.subr.bf16.mxu0 0
        %613 = vmatpush1.bf16.xpose.msra.mxu0 0
        %614 = vmatprep.subr.bf16.mxu0 0
        %615 = vmatpush1.bf16.xpose.msra.mxu0 0
        %616 = vmatprep.mubr.bf16.mxu0 0
        %617 = vmatmul.mubr.bf16.gmra.mrb[0].mxu0 %v579
        %v618 = vpop.f32.mrb[0].mxu0
        %v619 = vadd.f32 0.0, %v618
        %v620 = vpop.f32.mrb[0].mxu0
        %v621 = vpop.f32.mrb[0].mxu0
        %v622 = vpop.f32.mrb[0].mxu0
        %623 = vdwg.mxu0
        %v624 = vmul.f32 %v571, 0.17677669
        %v625 = vmul.f32 %v619, 0.17677669
        %v626 = vsel %vm456, 1, 0
        %v627 = vsel %vm457, 1, 0
        %v628 = vlaneseq
        %v629 = vshrl.u32 %v628, 7
        %v630 = vsub.s32 0, %v629
        %v631 = vrot.slane %v626, %v630
        %v632 = vlaneseq
        %v633 = vshrl.u32 %v632, 7
        %v634 = vsub.s32 0, %v633
        %v635 = vrot.slane %v627, %v634
        %vm636 = vcmp.eq.s32.totalorder %v631, 1
        %vm637 = vcmp.eq.s32.totalorder %v635, 1
        %v638 = vsel %vm636, -1e+09, %v624
        %v639 = vsel %vm637, -1e+09, %v625
        %v640 = vsel %vm529, %v638, -inf
        %641 = vmax.xlane.f32.xlu0 %v640
        %v642 = vpop.xlane.xlu0 %641
        %v643 = vsel %vm529, %v639, -inf
        %644 = vmax.xlane.f32.xlu0 %v643
        %v645 = vpop.xlane.xlu0 %644
        %v646 = vsub.f32 %v638, %v642
        %v647 = vsub.f32 %v639, %v645
        %v648 = vmul.f32 %v646, 1.442695
        %v649 = vpow.pop %v648
        %v650 = vmul.f32 %v647, 1.442695
        %v651 = vpow.pop %v650
        %v652 = vsel %vm529, %v649, 0.0
        %653 = vadd.xlane.f32.xlu0 %v652
        %v654 = vpop.xlane.xlu0 %653
        %v655 = vsel %vm529, %v651, 0.0
        %656 = vadd.xlane.f32.xlu0 %v655
        %v657 = vpop.xlane.xlu0 %656
        %v658 = vrcp.pop %v654
        %v659 = vrcp.pop %v657
        %v660 = vmul.f32 %v649, %v658
        %v661 = vmul.f32 %v651, %v659
        %v662 = vpack.c.bf16 %v660, %v660
        %v663 = vpack.c.bf16 %v661, %v661
        %664 = vrot.lane.b32.xlu0 %v525, 64
        %v665 = vpop.permute.xlu0 %664
        %v667 = vsel %vm529, %v662, 0
        %vm669 = vcmask 1043456
        %v671 = vsel %vm669, %v665, 0
        %673 = vmatprep.subr.bf16.mxu0 0
        %674 = vmatpush1.bf16.msra.mxu0 %v671
        %675 = vmatprep.subr.bf16.mxu0 0
        %676 = vmatpush1.bf16.msra.mxu0 0
        %677 = vmatprep.subr.bf16.mxu0 0
        %678 = vmatpush1.bf16.msra.mxu0 0
        %679 = vmatprep.subr.bf16.mxu0 0
        %680 = vmatpush1.bf16.msra.mxu0 0
        %681 = vmatprep.subr.bf16.mxu0 0
        %682 = vmatpush1.bf16.msra.mxu0 0
        %683 = vmatprep.subr.bf16.mxu0 0
        %684 = vmatpush1.bf16.msra.mxu0 0
        %685 = vmatprep.subr.bf16.mxu0 0
        %686 = vmatpush1.bf16.msra.mxu0 0
        %687 = vmatprep.subr.bf16.mxu0 0
        %688 = vmatpush1.bf16.msra.mxu0 0
        %689 = vmatprep.subr.bf16.mxu0 0
        %690 = vmatpush1.bf16.msra.mxu0 0
        %691 = vmatprep.subr.bf16.mxu0 0
        %692 = vmatpush1.bf16.msra.mxu0 0
        %693 = vmatprep.subr.bf16.mxu0 0
        %694 = vmatpush1.bf16.msra.mxu0 0
        %695 = vmatprep.subr.bf16.mxu0 0
        %696 = vmatpush1.bf16.msra.mxu0 0
        %697 = vmatprep.subr.bf16.mxu0 0
        %698 = vmatpush1.bf16.msra.mxu0 0
        %699 = vmatprep.subr.bf16.mxu0 0
        %700 = vmatpush1.bf16.msra.mxu0 0
        %701 = vmatprep.subr.bf16.mxu0 0
        %702 = vmatpush1.bf16.msra.mxu0 0
        %703 = vmatprep.subr.bf16.mxu0 0
        %704 = vmatpush1.bf16.msra.mxu0 0
        %705 = vmatprep.mubr.bf16.mxu0 0
        %706 = vmatmul.mubr.bf16.gmra.mrb[0].mxu0 %v667
        %v707 = vpop.f32.mrb[0].mxu0
        %v708 = vadd.f32 0.0, %v707
        %v709 = vpop.f32.mrb[0].mxu0
        %v710 = vpop.f32.mrb[0].mxu0
        %v711 = vpop.f32.mrb[0].mxu0
        %712 = vdwg.mxu0
        %713 = vrot.lane.b32.xlu0 %v526, 64
        %v714 = vpop.permute.xlu0 %713
        %v716 = vsel %vm529, %v663, 0
        %v719 = vsel %vm669, %v714, 0
        %721 = vmatprep.subr.bf16.mxu0 0
        %722 = vmatpush1.bf16.msra.mxu0 %v719
        %723 = vmatprep.subr.bf16.mxu0 0
        %724 = vmatpush1.bf16.msra.mxu0 0
        %725 = vmatprep.subr.bf16.mxu0 0
        %726 = vmatpush1.bf16.msra.mxu0 0
        %727 = vmatprep.subr.bf16.mxu0 0
        %728 = vmatpush1.bf16.msra.mxu0 0
        %729 = vmatprep.subr.bf16.mxu0 0
        %730 = vmatpush1.bf16.msra.mxu0 0
        %731 = vmatprep.subr.bf16.mxu0 0
        %732 = vmatpush1.bf16.msra.mxu0 0
        %733 = vmatprep.subr.bf16.mxu0 0
        %734 = vmatpush1.bf16.msra.mxu0 0
        %735 = vmatprep.subr.bf16.mxu0 0
        %736 = vmatpush1.bf16.msra.mxu0 0
        %737 = vmatprep.subr.bf16.mxu0 0
        %738 = vmatpush1.bf16.msra.mxu0 0
        %739 = vmatprep.subr.bf16.mxu0 0
        %740 = vmatpush1.bf16.msra.mxu0 0
        %741 = vmatprep.subr.bf16.mxu0 0
        %742 = vmatpush1.bf16.msra.mxu0 0
        %743 = vmatprep.subr.bf16.mxu0 0
        %744 = vmatpush1.bf16.msra.mxu0 0
        %745 = vmatprep.subr.bf16.mxu0 0
        %746 = vmatpush1.bf16.msra.mxu0 0
        %747 = vmatprep.subr.bf16.mxu0 0
        %748 = vmatpush1.bf16.msra.mxu0 0
        %749 = vmatprep.subr.bf16.mxu0 0
        %750 = vmatpush1.bf16.msra.mxu0 0
        %751 = vmatprep.subr.bf16.mxu0 0
        %752 = vmatpush1.bf16.msra.mxu0 0
        %753 = vmatprep.mubr.bf16.mxu0 0
        %754 = vmatmul.mubr.bf16.gmra.mrb[0].mxu0 %v716
        %v755 = vpop.f32.mrb[0].mxu0
        %v756 = vadd.f32 0.0, %v755
        %v757 = vpop.f32.mrb[0].mxu0
        %v758 = vpop.f32.mrb[0].mxu0
        %v759 = vpop.f32.mrb[0].mxu0
        %760 = vdwg.mxu0
        %761 = vrot.lane.b32.xlu0 %v525, 120
        %v762 = vpop.permute.xlu0 %761
        %763 = vrot.lane.b32.xlu0 %v525, 88
        %v764 = vpop.permute.xlu0 %763
        %v766 = vsel %vm529, %v762, 0
        %v769 = vsel %vm529, %v764, 0
        %771 = vmatprep.subr.bf16.mxu0 0
        %772 = vmatpush1.bf16.xpose.msra.mxu0 %v769
        %773 = vmatprep.subr.bf16.mxu0 0
        %774 = vmatpush1.bf16.xpose.msra.mxu0 0
        %775 = vmatprep.subr.bf16.mxu0 0
        %776 = vmatpush1.bf16.xpose.msra.mxu0 0
        %777 = vmatprep.subr.bf16.mxu0 0
        %778 = vmatpush1.bf16.xpose.msra.mxu0 0
        %779 = vmatprep.subr.bf16.mxu0 0
        %780 = vmatpush1.bf16.xpose.msra.mxu0 0
        %781 = vmatprep.subr.bf16.mxu0 0
        %782 = vmatpush1.bf16.xpose.msra.mxu0 0
        %783 = vmatprep.subr.bf16.mxu0 0
        %784 = vmatpush1.bf16.xpose.msra.mxu0 0
        %785 = vmatprep.subr.bf16.mxu0 0
        %786 = vmatpush1.bf16.xpose.msra.mxu0 0
        %787 = vmatprep.subr.bf16.mxu0 0
        %788 = vmatpush1.bf16.xpose.msra.mxu0 0
        %789 = vmatprep.subr.bf16.mxu0 0
        %790 = vmatpush1.bf16.xpose.msra.mxu0 0
        %791 = vmatprep.subr.bf16.mxu0 0
        %792 = vmatpush1.bf16.xpose.msra.mxu0 0
        %793 = vmatprep.subr.bf16.mxu0 0
        %794 = vmatpush1.bf16.xpose.msra.mxu0 0
        %795 = vmatprep.subr.bf16.mxu0 0
        %796 = vmatpush1.bf16.xpose.msra.mxu0 0
        %797 = vmatprep.subr.bf16.mxu0 0
        %798 = vmatpush1.bf16.xpose.msra.mxu0 0
        %799 = vmatprep.subr.bf16.mxu0 0
        %800 = vmatpush1.bf16.xpose.msra.mxu0 0
        %801 = vmatprep.subr.bf16.mxu0 0
        %802 = vmatpush1.bf16.xpose.msra.mxu0 0
        %803 = vmatprep.mubr.bf16.mxu0 0
        %804 = vmatmul.mubr.bf16.gmra.mrb[0].mxu0 %v766
        %v805 = vpop.f32.mrb[0].mxu0
        %v806 = vadd.f32 0.0, %v805
        %v807 = vpop.f32.mrb[0].mxu0
        %v808 = vpop.f32.mrb[0].mxu0
        %v809 = vpop.f32.mrb[0].mxu0
        %810 = vdwg.mxu0
        %811 = vrot.lane.b32.xlu0 %v526, 120
        %v812 = vpop.permute.xlu0 %811
        %813 = vrot.lane.b32.xlu0 %v526, 88
        %v814 = vpop.permute.xlu0 %813
        %v816 = vsel %vm529, %v812, 0
        %v819 = vsel %vm529, %v814, 0
        %821 = vmatprep.subr.bf16.mxu0 0
        %822 = vmatpush1.bf16.xpose.msra.mxu0 %v819
        %823 = vmatprep.subr.bf16.mxu0 0
        %824 = vmatpush1.bf16.xpose.msra.mxu0 0
        %825 = vmatprep.subr.bf16.mxu0 0
        %826 = vmatpush1.bf16.xpose.msra.mxu0 0
        %827 = vmatprep.subr.bf16.mxu0 0
        %828 = vmatpush1.bf16.xpose.msra.mxu0 0
        %829 = vmatprep.subr.bf16.mxu0 0
        %830 = vmatpush1.bf16.xpose.msra.mxu0 0
        %831 = vmatprep.subr.bf16.mxu0 0
        %832 = vmatpush1.bf16.xpose.msra.mxu0 0
        %833 = vmatprep.subr.bf16.mxu0 0
        %834 = vmatpush1.bf16.xpose.msra.mxu0 0
        %835 = vmatprep.subr.bf16.mxu0 0
        %836 = vmatpush1.bf16.xpose.msra.mxu0 0
        %837 = vmatprep.subr.bf16.mxu0 0
        %838 = vmatpush1.bf16.xpose.msra.mxu0 0
        %839 = vmatprep.subr.bf16.mxu0 0
        %840 = vmatpush1.bf16.xpose.msra.mxu0 0
        %841 = vmatprep.subr.bf16.mxu0 0
        %842 = vmatpush1.bf16.xpose.msra.mxu0 0
        %843 = vmatprep.subr.bf16.mxu0 0
        %844 = vmatpush1.bf16.xpose.msra.mxu0 0
        %845 = vmatprep.subr.bf16.mxu0 0
        %846 = vmatpush1.bf16.xpose.msra.mxu0 0
        %847 = vmatprep.subr.bf16.mxu0 0
        %848 = vmatpush1.bf16.xpose.msra.mxu0 0
        %849 = vmatprep.subr.bf16.mxu0 0
        %850 = vmatpush1.bf16.xpose.msra.mxu0 0
        %851 = vmatprep.subr.bf16.mxu0 0
        %852 = vmatpush1.bf16.xpose.msra.mxu0 0
        %853 = vmatprep.mubr.bf16.mxu0 0
        %854 = vmatmul.mubr.bf16.gmra.mrb[0].mxu0 %v816
        %v855 = vpop.f32.mrb[0].mxu0
        %v856 = vadd.f32 0.0, %v855
        %v857 = vpop.f32.mrb[0].mxu0
        %v858 = vpop.f32.mrb[0].mxu0
        %v859 = vpop.f32.mrb[0].mxu0
        %860 = vdwg.mxu0
        %v861 = vmul.f32 %v806, 0.17677669
        %v862 = vmul.f32 %v856, 0.17677669
        %v863 = vsel %vm636, -1e+09, %v861
        %v864 = vsel %vm637, -1e+09, %v862
        %v865 = vsel %vm529, %v863, -inf
        %866 = vmax.xlane.f32.xlu0 %v865
        %v867 = vpop.xlane.xlu0 %866
        %v868 = vsel %vm529, %v864, -inf
        %869 = vmax.xlane.f32.xlu0 %v868
        %v870 = vpop.xlane.xlu0 %869
        %v871 = vsub.f32 %v863, %v867
        %v872 = vsub.f32 %v864, %v870
        %v873 = vmul.f32 %v871, 1.442695
        %v874 = vpow.pop %v873
        %v875 = vmul.f32 %v872, 1.442695
        %v876 = vpow.pop %v875
        %v877 = vsel %vm529, %v874, 0.0
        %878 = vadd.xlane.f32.xlu0 %v877
        %v879 = vpop.xlane.xlu0 %878
        %v880 = vsel %vm529, %v876, 0.0
        %881 = vadd.xlane.f32.xlu0 %v880
        %v882 = vpop.xlane.xlu0 %881
        %v883 = vrcp.pop %v879
        %v884 = vrcp.pop %v882
        %v885 = vmul.f32 %v874, %v883
        %v886 = vmul.f32 %v876, %v884
        %v887 = vpack.c.bf16 %v885, %v885
        %v888 = vpack.c.bf16 %v886, %v886
        %889 = vrot.lane.b32.xlu0 %v525, 56
        %v890 = vpop.permute.xlu0 %889
        %v892 = vsel %vm529, %v887, 0
        %v895 = vsel %vm669, %v890, 0
        %897 = vmatprep.subr.bf16.mxu0 0
        %898 = vmatpush1.bf16.msra.mxu0 %v895
        %899 = vmatprep.subr.bf16.mxu0 0
        %900 = vmatpush1.bf16.msra.mxu0 0
        %901 = vmatprep.subr.bf16.mxu0 0
        %902 = vmatpush1.bf16.msra.mxu0 0
        %903 = vmatprep.subr.bf16.mxu0 0
        %904 = vmatpush1.bf16.msra.mxu0 0
        %905 = vmatprep.subr.bf16.mxu0 0
        %906 = vmatpush1.bf16.msra.mxu0 0
        %907 = vmatprep.subr.bf16.mxu0 0
        %908 = vmatpush1.bf16.msra.mxu0 0
        %909 = vmatprep.subr.bf16.mxu0 0
        %910 = vmatpush1.bf16.msra.mxu0 0
        %911 = vmatprep.subr.bf16.mxu0 0
        %912 = vmatpush1.bf16.msra.mxu0 0
        %913 = vmatprep.subr.bf16.mxu0 0
        %914 = vmatpush1.bf16.msra.mxu0 0
        %915 = vmatprep.subr.bf16.mxu0 0
        %916 = vmatpush1.bf16.msra.mxu0 0
        %917 = vmatprep.subr.bf16.mxu0 0
        %918 = vmatpush1.bf16.msra.mxu0 0
        %919 = vmatprep.subr.bf16.mxu0 0
        %920 = vmatpush1.bf16.msra.mxu0 0
        %921 = vmatprep.subr.bf16.mxu0 0
        %922 = vmatpush1.bf16.msra.mxu0 0
        %923 = vmatprep.subr.bf16.mxu0 0
        %924 = vmatpush1.bf16.msra.mxu0 0
        %925 = vmatprep.subr.bf16.mxu0 0
        %926 = vmatpush1.bf16.msra.mxu0 0
        %927 = vmatprep.subr.bf16.mxu0 0
        %928 = vmatpush1.bf16.msra.mxu0 0
        %929 = vmatprep.mubr.bf16.mxu0 0
        %930 = vmatmul.mubr.bf16.gmra.mrb[0].mxu0 %v892
        %v931 = vpop.f32.mrb[0].mxu0
        %v932 = vadd.f32 0.0, %v931
        %v933 = vpop.f32.mrb[0].mxu0
        %v934 = vpop.f32.mrb[0].mxu0
        %v935 = vpop.f32.mrb[0].mxu0
        %936 = vdwg.mxu0
        %937 = vrot.lane.b32.xlu0 %v526, 56
        %v938 = vpop.permute.xlu0 %937
        %v940 = vsel %vm529, %v888, 0
        %v943 = vsel %vm669, %v938, 0
        %945 = vmatprep.subr.bf16.mxu0 0
        %946 = vmatpush1.bf16.msra.mxu0 %v943
        %947 = vmatprep.subr.bf16.mxu0 0
        %948 = vmatpush1.bf16.msra.mxu0 0
        %949 = vmatprep.subr.bf16.mxu0 0
        %950 = vmatpush1.bf16.msra.mxu0 0
        %951 = vmatprep.subr.bf16.mxu0 0
        %952 = vmatpush1.bf16.msra.mxu0 0
        %953 = vmatprep.subr.bf16.mxu0 0
        %954 = vmatpush1.bf16.msra.mxu0 0
        %955 = vmatprep.subr.bf16.mxu0 0
        %956 = vmatpush1.bf16.msra.mxu0 0
        %957 = vmatprep.subr.bf16.mxu0 0
        %958 = vmatpush1.bf16.msra.mxu0 0
        %959 = vmatprep.subr.bf16.mxu0 0
        %960 = vmatpush1.bf16.msra.mxu0 0
        %961 = vmatprep.subr.bf16.mxu0 0
        %962 = vmatpush1.bf16.msra.mxu0 0
        %963 = vmatprep.subr.bf16.mxu0 0
        %964 = vmatpush1.bf16.msra.mxu0 0
        %965 = vmatprep.subr.bf16.mxu0 0
        %966 = vmatpush1.bf16.msra.mxu0 0
        %967 = vmatprep.subr.bf16.mxu0 0
        %968 = vmatpush1.bf16.msra.mxu0 0
        %969 = vmatprep.subr.bf16.mxu0 0
        %970 = vmatpush1.bf16.msra.mxu0 0
        %971 = vmatprep.subr.bf16.mxu0 0
        %972 = vmatpush1.bf16.msra.mxu0 0
        %973 = vmatprep.subr.bf16.mxu0 0
        %974 = vmatpush1.bf16.msra.mxu0 0
        %975 = vmatprep.subr.bf16.mxu0 0
        %976 = vmatpush1.bf16.msra.mxu0 0
        %977 = vmatprep.mubr.bf16.mxu0 0
        %978 = vmatmul.mubr.bf16.gmra.mrb[0].mxu0 %v940
        %v979 = vpop.f32.mrb[0].mxu0
        %v980 = vadd.f32 0.0, %v979
        %v981 = vpop.f32.mrb[0].mxu0
        %v982 = vpop.f32.mrb[0].mxu0
        %v983 = vpop.f32.mrb[0].mxu0
        %984 = vdwg.mxu0
        %985 = vrot.lane.b32.xlu0 %v525, 112
        %v986 = vpop.permute.xlu0 %985
        %987 = vrot.lane.b32.xlu0 %v525, 80
        %v988 = vpop.permute.xlu0 %987
        %v990 = vsel %vm529, %v986, 0
        %v993 = vsel %vm529, %v988, 0
        %995 = vmatprep.subr.bf16.mxu0 0
        %996 = vmatpush1.bf16.xpose.msra.mxu0 %v993
        %997 = vmatprep.subr.bf16.mxu0 0
        %998 = vmatpush1.bf16.xpose.msra.mxu0 0
        %999 = vmatprep.subr.bf16.mxu0 0
        %1000 = vmatpush1.bf16.xpose.msra.mxu0 0
        %1001 = vmatprep.subr.bf16.mxu0 0
        %1002 = vmatpush1.bf16.xpose.msra.mxu0 0
        %1003 = vmatprep.subr.bf16.mxu0 0
        %1004 = vmatpush1.bf16.xpose.msra.mxu0 0
        %1005 = vmatprep.subr.bf16.mxu0 0
        %1006 = vmatpush1.bf16.xpose.msra.mxu0 0
        %1007 = vmatprep.subr.bf16.mxu0 0
        %1008 = vmatpush1.bf16.xpose.msra.mxu0 0
        %1009 = vmatprep.subr.bf16.mxu0 0
        %1010 = vmatpush1.bf16.xpose.msra.mxu0 0
        %1011 = vmatprep.subr.bf16.mxu0 0
        %1012 = vmatpush1.bf16.xpose.msra.mxu0 0
        %1013 = vmatprep.subr.bf16.mxu0 0
        %1014 = vmatpush1.bf16.xpose.msra.mxu0 0
        %1015 = vmatprep.subr.bf16.mxu0 0
        %1016 = vmatpush1.bf16.xpose.msra.mxu0 0
        %1017 = vmatprep.subr.bf16.mxu0 0
        %1018 = vmatpush1.bf16.xpose.msra.mxu0 0
        %1019 = vmatprep.subr.bf16.mxu0 0
        %1020 = vmatpush1.bf16.xpose.msra.mxu0 0
        %1021 = vmatprep.subr.bf16.mxu0 0
        %1022 = vmatpush1.bf16.xpose.msra.mxu0 0
        %1023 = vmatprep.subr.bf16.mxu0 0
        %1024 = vmatpush1.bf16.xpose.msra.mxu0 0
        %1025 = vmatprep.subr.bf16.mxu0 0
        %1026 = vmatpush1.bf16.xpose.msra.mxu0 0
        %1027 = vmatprep.mubr.bf16.mxu0 0
        %1028 = vmatmul.mubr.bf16.gmra.mrb[0].mxu0 %v990
        %v1029 = vpop.f32.mrb[0].mxu0
        %v1030 = vadd.f32 0.0, %v1029
        %v1031 = vpop.f32.mrb[0].mxu0
        %v1032 = vpop.f32.mrb[0].mxu0
        %v1033 = vpop.f32.mrb[0].mxu0
        %1034 = vdwg.mxu0
        %1035 = vrot.lane.b32.xlu0 %v526, 112
        %v1036 = vpop.permute.xlu0 %1035
        %1037 = vrot.lane.b32.xlu0 %v526, 80
        %v1038 = vpop.permute.xlu0 %1037
        %v1040 = vsel %vm529, %v1036, 0
        %v1043 = vsel %vm529, %v1038, 0
        %1045 = vmatprep.subr.bf16.mxu0 0
        %1046 = vmatpush1.bf16.xpose.msra.mxu0 %v1043
        %1047 = vmatprep.subr.bf16.mxu0 0
        %1048 = vmatpush1.bf16.xpose.msra.mxu0 0
        %1049 = vmatprep.subr.bf16.mxu0 0
        %1050 = vmatpush1.bf16.xpose.msra.mxu0 0
        %1051 = vmatprep.subr.bf16.mxu0 0
        %1052 = vmatpush1.bf16.xpose.msra.mxu0 0
        %1053 = vmatprep.subr.bf16.mxu0 0
        %1054 = vmatpush1.bf16.xpose.msra.mxu0 0
        %1055 = vmatprep.subr.bf16.mxu0 0
        %1056 = vmatpush1.bf16.xpose.msra.mxu0 0
        %1057 = vmatprep.subr.bf16.mxu0 0
        %1058 = vmatpush1.bf16.xpose.msra.mxu0 0
        %1059 = vmatprep.subr.bf16.mxu0 0
        %1060 = vmatpush1.bf16.xpose.msra.mxu0 0
        %1061 = vmatprep.subr.bf16.mxu0 0
        %1062 = vmatpush1.bf16.xpose.msra.mxu0 0
        %1063 = vmatprep.subr.bf16.mxu0 0
        %1064 = vmatpush1.bf16.xpose.msra.mxu0 0
        %1065 = vmatprep.subr.bf16.mxu0 0
        %1066 = vmatpush1.bf16.xpose.msra.mxu0 0
        %1067 = vmatprep.subr.bf16.mxu0 0
        %1068 = vmatpush1.bf16.xpose.msra.mxu0 0
        %1069 = vmatprep.subr.bf16.mxu0 0
        %1070 = vmatpush1.bf16.xpose.msra.mxu0 0
        %1071 = vmatprep.subr.bf16.mxu0 0
        %1072 = vmatpush1.bf16.xpose.msra.mxu0 0
        %1073 = vmatprep.subr.bf16.mxu0 0
        %1074 = vmatpush1.bf16.xpose.msra.mxu0 0
        %1075 = vmatprep.subr.bf16.mxu0 0
        %1076 = vmatpush1.bf16.xpose.msra.mxu0 0
        %1077 = vmatprep.mubr.bf16.mxu0 0
        %1078 = vmatmul.mubr.bf16.gmra.mrb[0].mxu0 %v1040
        %v1079 = vpop.f32.mrb[0].mxu0
        %v1080 = vadd.f32 0.0, %v1079
        %v1081 = vpop.f32.mrb[0].mxu0
        %v1082 = vpop.f32.mrb[0].mxu0
        %v1083 = vpop.f32.mrb[0].mxu0
        %1084 = vdwg.mxu0
        %v1085 = vmul.f32 %v1030, 0.17677669
        %v1086 = vmul.f32 %v1080, 0.17677669
        %v1087 = vsel %vm636, -1e+09, %v1085
        %v1088 = vsel %vm637, -1e+09, %v1086
        %v1089 = vsel %vm529, %v1087, -inf
        %1090 = vmax.xlane.f32.xlu0 %v1089
        %v1091 = vpop.xlane.xlu0 %1090
        %v1092 = vsel %vm529, %v1088, -inf
        %1093 = vmax.xlane.f32.xlu0 %v1092
        %v1094 = vpop.xlane.xlu0 %1093
        %v1095 = vsub.f32 %v1087, %v1091
        %v1096 = vsub.f32 %v1088, %v1094
        %v1097 = vmul.f32 %v1095, 1.442695
        %v1098 = vpow.pop %v1097
        %v1099 = vmul.f32 %v1096, 1.442695
        %v1100 = vpow.pop %v1099
        %v1101 = vsel %vm529, %v1098, 0.0
        %1102 = vadd.xlane.f32.xlu0 %v1101
        %v1103 = vpop.xlane.xlu0 %1102
        %v1104 = vsel %vm529, %v1100, 0.0
        %1105 = vadd.xlane.f32.xlu0 %v1104
        %v1106 = vpop.xlane.xlu0 %1105
        %v1107 = vrcp.pop %v1103
        %v1108 = vrcp.pop %v1106
        %v1109 = vmul.f32 %v1098, %v1107
        %v1110 = vmul.f32 %v1100, %v1108
        %v1111 = vpack.c.bf16 %v1109, %v1109
        %v1112 = vpack.c.bf16 %v1110, %v1110
        %1113 = vrot.lane.b32.xlu0 %v525, 48
        %v1114 = vpop.permute.xlu0 %1113
        %v1116 = vsel %vm529, %v1111, 0
        %v1119 = vsel %vm669, %v1114, 0
        %1121 = vmatprep.subr.bf16.mxu0 0
        %1122 = vmatpush1.bf16.msra.mxu0 %v1119
        %1123 = vmatprep.subr.bf16.mxu0 0
        %1124 = vmatpush1.bf16.msra.mxu0 0
        %1125 = vmatprep.subr.bf16.mxu0 0
        %1126 = vmatpush1.bf16.msra.mxu0 0
        %1127 = vmatprep.subr.bf16.mxu0 0
        %1128 = vmatpush1.bf16.msra.mxu0 0
        %1129 = vmatprep.subr.bf16.mxu0 0
        %1130 = vmatpush1.bf16.msra.mxu0 0
        %1131 = vmatprep.subr.bf16.mxu0 0
        %1132 = vmatpush1.bf16.msra.mxu0 0
        %1133 = vmatprep.subr.bf16.mxu0 0
        %1134 = vmatpush1.bf16.msra.mxu0 0
        %1135 = vmatprep.subr.bf16.mxu0 0
        %1136 = vmatpush1.bf16.msra.mxu0 0
        %1137 = vmatprep.subr.bf16.mxu0 0
        %1138 = vmatpush1.bf16.msra.mxu0 0
        %1139 = vmatprep.subr.bf16.mxu0 0
        %1140 = vmatpush1.bf16.msra.mxu0 0
        %1141 = vmatprep.subr.bf16.mxu0 0
        %1142 = vmatpush1.bf16.msra.mxu0 0
        %1143 = vmatprep.subr.bf16.mxu0 0
        %1144 = vmatpush1.bf16.msra.mxu0 0
        %1145 = vmatprep.subr.bf16.mxu0 0
        %1146 = vmatpush1.bf16.msra.mxu0 0
        %1147 = vmatprep.subr.bf16.mxu0 0
        %1148 = vmatpush1.bf16.msra.mxu0 0
        %1149 = vmatprep.subr.bf16.mxu0 0
        %1150 = vmatpush1.bf16.msra.mxu0 0
        %1151 = vmatprep.subr.bf16.mxu0 0
        %1152 = vmatpush1.bf16.msra.mxu0 0
        %1153 = vmatprep.mubr.bf16.mxu0 0
        %1154 = vmatmul.mubr.bf16.gmra.mrb[0].mxu0 %v1116
        %v1155 = vpop.f32.mrb[0].mxu0
        %v1156 = vadd.f32 0.0, %v1155
        %v1157 = vpop.f32.mrb[0].mxu0
        %v1158 = vpop.f32.mrb[0].mxu0
        %v1159 = vpop.f32.mrb[0].mxu0
        %1160 = vdwg.mxu0
        %1161 = vrot.lane.b32.xlu0 %v526, 48
        %v1162 = vpop.permute.xlu0 %1161
        %v1164 = vsel %vm529, %v1112, 0
        %v1167 = vsel %vm669, %v1162, 0
        %1169 = vmatprep.subr.bf16.mxu0 0
        %1170 = vmatpush1.bf16.msra.mxu0 %v1167
        %1171 = vmatprep.subr.bf16.mxu0 0
        %1172 = vmatpush1.bf16.msra.mxu0 0
        %1173 = vmatprep.subr.bf16.mxu0 0
        %1174 = vmatpush1.bf16.msra.mxu0 0
        %1175 = vmatprep.subr.bf16.mxu0 0
        %1176 = vmatpush1.bf16.msra.mxu0 0
        %1177 = vmatprep.subr.bf16.mxu0 0
        %1178 = vmatpush1.bf16.msra.mxu0 0
        %1179 = vmatprep.subr.bf16.mxu0 0
        %1180 = vmatpush1.bf16.msra.mxu0 0
        %1181 = vmatprep.subr.bf16.mxu0 0
        %1182 = vmatpush1.bf16.msra.mxu0 0
        %1183 = vmatprep.subr.bf16.mxu0 0
        %1184 = vmatpush1.bf16.msra.mxu0 0
        %1185 = vmatprep.subr.bf16.mxu0 0
        %1186 = vmatpush1.bf16.msra.mxu0 0
        %1187 = vmatprep.subr.bf16.mxu0 0
        %1188 = vmatpush1.bf16.msra.mxu0 0
        %1189 = vmatprep.subr.bf16.mxu0 0
        %1190 = vmatpush1.bf16.msra.mxu0 0
        %1191 = vmatprep.subr.bf16.mxu0 0
        %1192 = vmatpush1.bf16.msra.mxu0 0
        %1193 = vmatprep.subr.bf16.mxu0 0
        %1194 = vmatpush1.bf16.msra.mxu0 0
        %1195 = vmatprep.subr.bf16.mxu0 0
        %1196 = vmatpush1.bf16.msra.mxu0 0
        %1197 = vmatprep.subr.bf16.mxu0 0
        %1198 = vmatpush1.bf16.msra.mxu0 0
        %1199 = vmatprep.subr.bf16.mxu0 0
        %1200 = vmatpush1.bf16.msra.mxu0 0
        %1201 = vmatprep.mubr.bf16.mxu0 0
        %1202 = vmatmul.mubr.bf16.gmra.mrb[0].mxu0 %v1164
        %v1203 = vpop.f32.mrb[0].mxu0
        %v1204 = vadd.f32 0.0, %v1203
        %v1205 = vpop.f32.mrb[0].mxu0
        %v1206 = vpop.f32.mrb[0].mxu0
        %v1207 = vpop.f32.mrb[0].mxu0
        %1208 = vdwg.mxu0
        %1209 = vrot.lane.b32.xlu0 %v525, 104
        %v1210 = vpop.permute.xlu0 %1209
        %1211 = vrot.lane.b32.xlu0 %v525, 72
        %v1212 = vpop.permute.xlu0 %1211
        %v1214 = vsel %vm529, %v1210, 0
        %v1217 = vsel %vm529, %v1212, 0
        %1219 = vmatprep.subr.bf16.mxu0 0
        %1220 = vmatpush1.bf16.xpose.msra.mxu0 %v1217
        %1221 = vmatprep.subr.bf16.mxu0 0
        %1222 = vmatpush1.bf16.xpose.msra.mxu0 0
        %1223 = vmatprep.subr.bf16.mxu0 0
        %1224 = vmatpush1.bf16.xpose.msra.mxu0 0
        %1225 = vmatprep.subr.bf16.mxu0 0
        %1226 = vmatpush1.bf16.xpose.msra.mxu0 0
        %1227 = vmatprep.subr.bf16.mxu0 0
        %1228 = vmatpush1.bf16.xpose.msra.mxu0 0
        %1229 = vmatprep.subr.bf16.mxu0 0
        %1230 = vmatpush1.bf16.xpose.msra.mxu0 0
        %1231 = vmatprep.subr.bf16.mxu0 0
        %1232 = vmatpush1.bf16.xpose.msra.mxu0 0
        %1233 = vmatprep.subr.bf16.mxu0 0
        %1234 = vmatpush1.bf16.xpose.msra.mxu0 0
        %1235 = vmatprep.subr.bf16.mxu0 0
        %1236 = vmatpush1.bf16.xpose.msra.mxu0 0
        %1237 = vmatprep.subr.bf16.mxu0 0
        %1238 = vmatpush1.bf16.xpose.msra.mxu0 0
        %1239 = vmatprep.subr.bf16.mxu0 0
        %1240 = vmatpush1.bf16.xpose.msra.mxu0 0
        %1241 = vmatprep.subr.bf16.mxu0 0
        %1242 = vmatpush1.bf16.xpose.msra.mxu0 0
        %1243 = vmatprep.subr.bf16.mxu0 0
        %1244 = vmatpush1.bf16.xpose.msra.mxu0 0
        %1245 = vmatprep.subr.bf16.mxu0 0
        %1246 = vmatpush1.bf16.xpose.msra.mxu0 0
        %1247 = vmatprep.subr.bf16.mxu0 0
        %1248 = vmatpush1.bf16.xpose.msra.mxu0 0
        %1249 = vmatprep.subr.bf16.mxu0 0
        %1250 = vmatpush1.bf16.xpose.msra.mxu0 0
        %1251 = vmatprep.mubr.bf16.mxu0 0
        %1252 = vmatmul.mubr.bf16.gmra.mrb[0].mxu0 %v1214
        %v1253 = vpop.f32.mrb[0].mxu0
        %v1254 = vadd.f32 0.0, %v1253
        %v1255 = vpop.f32.mrb[0].mxu0
        %v1256 = vpop.f32.mrb[0].mxu0
        %v1257 = vpop.f32.mrb[0].mxu0
        %1258 = vdwg.mxu0
        %1259 = vrot.lane.b32.xlu0 %v526, 104
        %v1260 = vpop.permute.xlu0 %1259
        %1261 = vrot.lane.b32.xlu0 %v526, 72
        %v1262 = vpop.permute.xlu0 %1261
        %v1264 = vsel %vm529, %v1260, 0
        %v1267 = vsel %vm529, %v1262, 0
        %1269 = vmatprep.subr.bf16.mxu0 0
        %1270 = vmatpush1.bf16.xpose.msra.mxu0 %v1267
        %1271 = vmatprep.subr.bf16.mxu0 0
        %1272 = vmatpush1.bf16.xpose.msra.mxu0 0
        %1273 = vmatprep.subr.bf16.mxu0 0
        %1274 = vmatpush1.bf16.xpose.msra.mxu0 0
        %1275 = vmatprep.subr.bf16.mxu0 0
        %1276 = vmatpush1.bf16.xpose.msra.mxu0 0
        %1277 = vmatprep.subr.bf16.mxu0 0
        %1278 = vmatpush1.bf16.xpose.msra.mxu0 0
        %1279 = vmatprep.subr.bf16.mxu0 0
        %1280 = vmatpush1.bf16.xpose.msra.mxu0 0
        %1281 = vmatprep.subr.bf16.mxu0 0
        %1282 = vmatpush1.bf16.xpose.msra.mxu0 0
        %1283 = vmatprep.subr.bf16.mxu0 0
        %1284 = vmatpush1.bf16.xpose.msra.mxu0 0
        %1285 = vmatprep.subr.bf16.mxu0 0
        %1286 = vmatpush1.bf16.xpose.msra.mxu0 0
        %1287 = vmatprep.subr.bf16.mxu0 0
        %1288 = vmatpush1.bf16.xpose.msra.mxu0 0
        %1289 = vmatprep.subr.bf16.mxu0 0
        %1290 = vmatpush1.bf16.xpose.msra.mxu0 0
        %1291 = vmatprep.subr.bf16.mxu0 0
        %1292 = vmatpush1.bf16.xpose.msra.mxu0 0
        %1293 = vmatprep.subr.bf16.mxu0 0
        %1294 = vmatpush1.bf16.xpose.msra.mxu0 0
        %1295 = vmatprep.subr.bf16.mxu0 0
        %1296 = vmatpush1.bf16.xpose.msra.mxu0 0
        %1297 = vmatprep.subr.bf16.mxu0 0
        %1298 = vmatpush1.bf16.xpose.msra.mxu0 0
        %1299 = vmatprep.subr.bf16.mxu0 0
        %1300 = vmatpush1.bf16.xpose.msra.mxu0 0
        %1301 = vmatprep.mubr.bf16.mxu0 0
        %1302 = vmatmul.mubr.bf16.gmra.mrb[0].mxu0 %v1264
        %v1303 = vpop.f32.mrb[0].mxu0
        %v1304 = vadd.f32 0.0, %v1303
        %v1305 = vpop.f32.mrb[0].mxu0
        %v1306 = vpop.f32.mrb[0].mxu0
        %v1307 = vpop.f32.mrb[0].mxu0
        %1308 = vdwg.mxu0
        %v1309 = vmul.f32 %v1254, 0.17677669
        %v1310 = vmul.f32 %v1304, 0.17677669
        %v1311 = vsel %vm636, -1e+09, %v1309
        %v1312 = vsel %vm637, -1e+09, %v1310
        %v1313 = vsel %vm529, %v1311, -inf
        %1314 = vmax.xlane.f32.xlu0 %v1313
        %v1315 = vpop.xlane.xlu0 %1314
        %v1316 = vsel %vm529, %v1312, -inf
        %1317 = vmax.xlane.f32.xlu0 %v1316
        %v1318 = vpop.xlane.xlu0 %1317
        %v1319 = vsub.f32 %v1311, %v1315
        %v1320 = vsub.f32 %v1312, %v1318
        %v1321 = vmul.f32 %v1319, 1.442695
        %v1322 = vpow.pop %v1321
        %v1323 = vmul.f32 %v1320, 1.442695
        %v1324 = vpow.pop %v1323
        %v1325 = vsel %vm529, %v1322, 0.0
        %1326 = vadd.xlane.f32.xlu0 %v1325
        %v1327 = vpop.xlane.xlu0 %1326
        %v1328 = vsel %vm529, %v1324, 0.0
        %1329 = vadd.xlane.f32.xlu0 %v1328
        %v1330 = vpop.xlane.xlu0 %1329
        %v1331 = vrcp.pop %v1327
        %v1332 = vrcp.pop %v1330
        %v1333 = vmul.f32 %v1322, %v1331
        %v1334 = vmul.f32 %v1324, %v1332
        %v1335 = vpack.c.bf16 %v1333, %v1333
        %v1336 = vpack.c.bf16 %v1334, %v1334
        %1337 = vrot.lane.b32.xlu0 %v525, 40
        %v1338 = vpop.permute.xlu0 %1337
        %v1340 = vsel %vm529, %v1335, 0
        %v1343 = vsel %vm669, %v1338, 0
        %1345 = vmatprep.subr.bf16.mxu0 0
        %1346 = vmatpush1.bf16.msra.mxu0 %v1343
        %1347 = vmatprep.subr.bf16.mxu0 0
        %1348 = vmatpush1.bf16.msra.mxu0 0
        %1349 = vmatprep.subr.bf16.mxu0 0
        %1350 = vmatpush1.bf16.msra.mxu0 0
        %1351 = vmatprep.subr.bf16.mxu0 0
        %1352 = vmatpush1.bf16.msra.mxu0 0
        %1353 = vmatprep.subr.bf16.mxu0 0
        %1354 = vmatpush1.bf16.msra.mxu0 0
        %1355 = vmatprep.subr.bf16.mxu0 0
        %1356 = vmatpush1.bf16.msra.mxu0 0
        %1357 = vmatprep.subr.bf16.mxu0 0
        %1358 = vmatpush1.bf16.msra.mxu0 0
        %1359 = vmatprep.subr.bf16.mxu0 0
        %1360 = vmatpush1.bf16.msra.mxu0 0
        %1361 = vmatprep.subr.bf16.mxu0 0
        %1362 = vmatpush1.bf16.msra.mxu0 0
        %1363 = vmatprep.subr.bf16.mxu0 0
        %1364 = vmatpush1.bf16.msra.mxu0 0
        %1365 = vmatprep.subr.bf16.mxu0 0
        %1366 = vmatpush1.bf16.msra.mxu0 0
        %1367 = vmatprep.subr.bf16.mxu0 0
        %1368 = vmatpush1.bf16.msra.mxu0 0
        %1369 = vmatprep.subr.bf16.mxu0 0
        %1370 = vmatpush1.bf16.msra.mxu0 0
        %1371 = vmatprep.subr.bf16.mxu0 0
        %1372 = vmatpush1.bf16.msra.mxu0 0
        %1373 = vmatprep.subr.bf16.mxu0 0
        %1374 = vmatpush1.bf16.msra.mxu0 0
        %1375 = vmatprep.subr.bf16.mxu0 0
        %1376 = vmatpush1.bf16.msra.mxu0 0
        %1377 = vmatprep.mubr.bf16.mxu0 0
        %1378 = vmatmul.mubr.bf16.gmra.mrb[0].mxu0 %v1340
        %v1379 = vpop.f32.mrb[0].mxu0
        %v1380 = vadd.f32 0.0, %v1379
        %v1381 = vpop.f32.mrb[0].mxu0
        %v1382 = vpop.f32.mrb[0].mxu0
        %v1383 = vpop.f32.mrb[0].mxu0
        %1384 = vdwg.mxu0
        %1385 = vrot.lane.b32.xlu0 %v526, 40
        %v1386 = vpop.permute.xlu0 %1385
        %v1388 = vsel %vm529, %v1336, 0
        %v1391 = vsel %vm669, %v1386, 0
        %1393 = vmatprep.subr.bf16.mxu0 0
        %1394 = vmatpush1.bf16.msra.mxu0 %v1391
        %1395 = vmatprep.subr.bf16.mxu0 0
        %1396 = vmatpush1.bf16.msra.mxu0 0
        %1397 = vmatprep.subr.bf16.mxu0 0
        %1398 = vmatpush1.bf16.msra.mxu0 0
        %1399 = vmatprep.subr.bf16.mxu0 0
        %1400 = vmatpush1.bf16.msra.mxu0 0
        %1401 = vmatprep.subr.bf16.mxu0 0
        %1402 = vmatpush1.bf16.msra.mxu0 0
        %1403 = vmatprep.subr.bf16.mxu0 0
        %1404 = vmatpush1.bf16.msra.mxu0 0
        %1405 = vmatprep.subr.bf16.mxu0 0
        %1406 = vmatpush1.bf16.msra.mxu0 0
        %1407 = vmatprep.subr.bf16.mxu0 0
        %1408 = vmatpush1.bf16.msra.mxu0 0
        %1409 = vmatprep.subr.bf16.mxu0 0
        %1410 = vmatpush1.bf16.msra.mxu0 0
        %1411 = vmatprep.subr.bf16.mxu0 0
        %1412 = vmatpush1.bf16.msra.mxu0 0
        %1413 = vmatprep.subr.bf16.mxu0 0
        %1414 = vmatpush1.bf16.msra.mxu0 0
        %1415 = vmatprep.subr.bf16.mxu0 0
        %1416 = vmatpush1.bf16.msra.mxu0 0
        %1417 = vmatprep.subr.bf16.mxu0 0
        %1418 = vmatpush1.bf16.msra.mxu0 0
        %1419 = vmatprep.subr.bf16.mxu0 0
        %1420 = vmatpush1.bf16.msra.mxu0 0
        %1421 = vmatprep.subr.bf16.mxu0 0
        %1422 = vmatpush1.bf16.msra.mxu0 0
        %1423 = vmatprep.subr.bf16.mxu0 0
        %1424 = vmatpush1.bf16.msra.mxu0 0
        %1425 = vmatprep.mubr.bf16.mxu0 0
        %1426 = vmatmul.mubr.bf16.gmra.mrb[0].mxu0 %v1388
        %v1427 = vpop.f32.mrb[0].mxu0
        %v1428 = vadd.f32 0.0, %v1427
        %v1429 = vpop.f32.mrb[0].mxu0
        %v1430 = vpop.f32.mrb[0].mxu0
        %v1431 = vpop.f32.mrb[0].mxu0
        %1432 = vdwg.mxu0
        %1435 = vrot.lane.b32.xlu0 %v932, 8
        %v1436 = vpop.permute.xlu0 %1435
        %1437 = vrot.lane.b32.xlu0 %v980, 8
        %v1438 = vpop.permute.xlu0 %1437
        %1443 = vrot.lane.b32.xlu0 %v1156, 16
        %v1444 = vpop.permute.xlu0 %1443
        %1445 = vrot.lane.b32.xlu0 %v1204, 16
        %v1446 = vpop.permute.xlu0 %1445
        %1451 = vrot.lane.b32.xlu0 %v1380, 24
        %v1452 = vpop.permute.xlu0 %1451
        %1453 = vrot.lane.b32.xlu0 %v1428, 24
        %v1454 = vpop.permute.xlu0 %1453
        %v1457 = vsel %vm529, %v708, %v1436
        %v1458 = vsel %vm529, %v756, %v1438
        %vm1459 = vcmask 130048
        %v1460 = vsel %vm1459, %v1457, %v1444
        %v1461 = vsel %vm1459, %v1458, %v1446
        %vm1462 = vcmask 195584
        %v1463 = vsel %vm1462, %v1460, %v1452
        %v1464 = vsel %vm1462, %v1461, %v1454
        %v1465 = vpack.c.bf16 %v1464, %v1463
        %v1466 = vld [vmem:[%s423] sm:$0xf]
        %v1467 = vld [vmem:[%s423 + $0x4] sm:$0xf]
        %v1468 = vld [vmem:[%s423 + $0x8] sm:$0xf]
        %v1469 = vld [vmem:[%s423 + $0xc] sm:$0xf]
        %v1470 = vlaneseq
        %v1471 = vshrl.u32 %v1470, 7
        %v1472 = vsub.s32 0, %v1471
        %v1473 = vrot.slane %v458, %v1472
        %v1478 = vunpack.c.l.b16 %v1466
        %v1479 = vunpack.c.l.b16 %v1467
        %v1480 = vunpack.c.l.b16 %v1468
        %v1481 = vunpack.c.l.b16 %v1469
        %v1482 = vpack.c.b16 %v1479, %v1478
        %v1483 = vpack.c.b16 %v1481, %v1480
        %v1487 = vsel %vm476, %v1465, 0
        %1489 = vmatprep.subr.bf16.mxu0 0
        %1490 = vmatpush1.bf16.msra.mxu0 %v1482
        %1491 = vmatprep.subr.bf16.mxu0 0
        %1492 = vmatpush1.bf16.msra.mxu0 %v1483
        %1493 = vmatprep.subr.bf16.mxu0 0
        %1494 = vmatpush1.bf16.msra.mxu0 0
        %1495 = vmatprep.subr.bf16.mxu0 0
        %1496 = vmatpush1.bf16.msra.mxu0 0
        %1497 = vmatprep.subr.bf16.mxu0 0
        %1498 = vmatpush1.bf16.msra.mxu0 0
        %1499 = vmatprep.subr.bf16.mxu0 0
        %1500 = vmatpush1.bf16.msra.mxu0 0
        %1501 = vmatprep.subr.bf16.mxu0 0
        %1502 = vmatpush1.bf16.msra.mxu0 0
        %1503 = vmatprep.subr.bf16.mxu0 0
        %1504 = vmatpush1.bf16.msra.mxu0 0
        %1505 = vmatprep.subr.bf16.mxu0 0
        %1506 = vmatpush1.bf16.msra.mxu0 0
        %1507 = vmatprep.subr.bf16.mxu0 0
        %1508 = vmatpush1.bf16.msra.mxu0 0
        %1509 = vmatprep.subr.bf16.mxu0 0
        %1510 = vmatpush1.bf16.msra.mxu0 0
        %1511 = vmatprep.subr.bf16.mxu0 0
        %1512 = vmatpush1.bf16.msra.mxu0 0
        %1513 = vmatprep.subr.bf16.mxu0 0
        %1514 = vmatpush1.bf16.msra.mxu0 0
        %1515 = vmatprep.subr.bf16.mxu0 0
        %1516 = vmatpush1.bf16.msra.mxu0 0
        %1517 = vmatprep.subr.bf16.mxu0 0
        %1518 = vmatpush1.bf16.msra.mxu0 0
        %1519 = vmatprep.subr.bf16.mxu0 0
        %1520 = vmatpush1.bf16.msra.mxu0 0
        %1521 = vmatprep.mubr.bf16.mxu0 0
        %1522 = vmatmul.mubr.bf16.gmra.mrb[0].mxu0 %v1487
        %v1523 = vpop.f32.mrb[0].mxu0
        %v1524 = vadd.f32 %v1473, %v1523
        %v1525 = vpop.f32.mrb[0].mxu0
        %v1526 = vpop.f32.mrb[0].mxu0
        %v1527 = vadd.f32 %v1473, %v1526
        %v1528 = vpop.f32.mrb[0].mxu0
        %1529 = vdwg.mxu0
        %v1530 = vadd.f32 %v1524, %v452
        %v1531 = vadd.f32 %v1527, %v453
        %v1532 = vsel %vm476, %v1530, 0.0
        %1533 = vadd.xlane.f32.xlu0 %v1532
        %v1534 = vpop.xlane.xlu0 %1533
        %v1535 = vsel %vm476, %v1531, 0.0
        %1536 = vadd.xlane.f32.xlu0 %v1535
        %v1537 = vpop.xlane.xlu0 %1536
        %v1538 = vrcp.pop 32.0
        %v1539 = vmul.f32 %v1534, %v1538
        %v1540 = vmul.f32 %v1537, %v1538
        %v1541 = vsub.f32 %v1530, %v1539
        %v1542 = vsub.f32 %v1531, %v1540
        %v1543 = vmul.f32 %v1541, %v1541
        %v1544 = vmul.f32 %v1542, %v1542
        %v1545 = vsel %vm476, %v1543, 0.0
        %1546 = vadd.xlane.f32.xlu0 %v1545
        %v1547 = vpop.xlane.xlu0 %1546
        %v1548 = vsel %vm476, %v1544, 0.0
        %1549 = vadd.xlane.f32.xlu0 %v1548
        %v1550 = vpop.xlane.xlu0 %1549
        %v1551 = vrcp.pop 31.0
        %v1552 = vmul.f32 %v1547, %v1551
        %v1553 = vmul.f32 %v1550, %v1551
        %v1554 = vrsqrt.pop %v1552
        %v1555 = vmul.f32 %v1552, %v1554
        %vm1556 = vcmp.eq.f32.partialorder %v1552, inf
        %v1557 = vsel %vm1556, %v1552, %v1555
        %vm1558 = vcmp.eq.f32.partialorder %v1552, 0.0
        %v1559 = vand.u32 %v1552, 2147483648
        %v1560 = vsel %vm1558, %v1559, %v1557
        %v1561 = vrsqrt.pop %v1553
        %v1562 = vmul.f32 %v1553, %v1561
        %vm1563 = vcmp.eq.f32.partialorder %v1553, inf
        %v1564 = vsel %vm1563, %v1553, %v1562
        %vm1565 = vcmp.eq.f32.partialorder %v1553, 0.0
        %v1566 = vand.u32 %v1553, 2147483648
        %v1567 = vsel %vm1565, %v1566, %v1564
        %v1568 = vadd.f32 %v1560, 0.001
        %v1569 = vadd.f32 %v1567, 0.001
        %v1570 = vrcp.pop %v1568
        %v1571 = vrcp.pop %v1569
        %v1572 = vmul.f32 %v1541, %v1570
        %v1573 = vmul.f32 %v1542, %v1571
        %v1574 = vlaneseq
        %v1575 = vshrl.u32 %v1574, 7
        %v1576 = vsub.s32 1, %v1575
        %v1577 = vrot.slane %v458, %v1576
        %v1578 = vmul.f32 %v1572, %v1577
        %v1579 = vmul.f32 %v1573, %v1577
        %v1580 = vlaneseq
        %v1581 = vshrl.u32 %v1580, 7
        %v1582 = vsub.s32 2, %v1581
        %v1583 = vrot.slane %v458, %v1582
        %v1584 = vadd.f32 %v1578, %v1583
        %v1585 = vadd.f32 %v1579, %v1583
        %v1586 = vpack.c.bf16 %v1585, %v1584
        %v1587 = vld [vmem:[%s428] sm:$0xf]
        %v1588 = vld [vmem:[%s428 + $0x4] sm:$0xf]
        %v1589 = vld [vmem:[%s428 + $0x8] sm:$0xf]
        %v1590 = vld [vmem:[%s428 + $0xc] sm:$0xf]
        %v1591 = vld [vmem:[%s440] sm:$0x1]
        %v1593 = vlaneseq
        %v1594 = vshrl.u32 %v1593, 7
        %v1595 = vsub.s32 0, %v1594
        %v1596 = vrot.slane %v1591, %v1595
        %v1602 = vunpack.c.l.b16 %v1587
        %v1603 = vunpack.c.l.b16 %v1588
        %v1604 = vunpack.c.l.b16 %v1589
        %v1605 = vunpack.c.l.b16 %v1590
        %v1606 = vpack.c.b16 %v1603, %v1602
        %v1607 = vpack.c.b16 %v1605, %v1604
        %v1611 = vsel %vm476, %v1586, 0
        %1613 = vmatprep.subr.bf16.mxu0 0
        %1614 = vmatpush1.bf16.msra.mxu0 %v1606
        %1615 = vmatprep.subr.bf16.mxu0 0
        %1616 = vmatpush1.bf16.msra.mxu0 %v1607
        %1617 = vmatprep.subr.bf16.mxu0 0
        %1618 = vmatpush1.bf16.msra.mxu0 0
        %1619 = vmatprep.subr.bf16.mxu0 0
        %1620 = vmatpush1.bf16.msra.mxu0 0
        %1621 = vmatprep.subr.bf16.mxu0 0
        %1622 = vmatpush1.bf16.msra.mxu0 0
        %1623 = vmatprep.subr.bf16.mxu0 0
        %1624 = vmatpush1.bf16.msra.mxu0 0
        %1625 = vmatprep.subr.bf16.mxu0 0
        %1626 = vmatpush1.bf16.msra.mxu0 0
        %1627 = vmatprep.subr.bf16.mxu0 0
        %1628 = vmatpush1.bf16.msra.mxu0 0
        %1629 = vmatprep.subr.bf16.mxu0 0
        %1630 = vmatpush1.bf16.msra.mxu0 0
        %1631 = vmatprep.subr.bf16.mxu0 0
        %1632 = vmatpush1.bf16.msra.mxu0 0
        %1633 = vmatprep.subr.bf16.mxu0 0
        %1634 = vmatpush1.bf16.msra.mxu0 0
        %1635 = vmatprep.subr.bf16.mxu0 0
        %1636 = vmatpush1.bf16.msra.mxu0 0
        %1637 = vmatprep.subr.bf16.mxu0 0
        %1638 = vmatpush1.bf16.msra.mxu0 0
        %1639 = vmatprep.subr.bf16.mxu0 0
        %1640 = vmatpush1.bf16.msra.mxu0 0
        %1641 = vmatprep.subr.bf16.mxu0 0
        %1642 = vmatpush1.bf16.msra.mxu0 0
        %1643 = vmatprep.subr.bf16.mxu0 0
        %1644 = vmatpush1.bf16.msra.mxu0 0
        %1645 = vmatprep.mubr.bf16.mxu0 0
        %1646 = vmatmul.mubr.bf16.gmra.mrb[0].mxu0 %v1611
        %v1647 = vpop.f32.mrb[0].mxu0
        %v1648 = vadd.f32 %v1596, %v1647
        %v1649 = vpop.f32.mrb[0].mxu0
        %v1650 = vpop.f32.mrb[0].mxu0
        %v1651 = vadd.f32 %v1596, %v1650
        %v1652 = vpop.f32.mrb[0].mxu0
        %1653 = vdwg.mxu0
        %v1654 = vmax.f32 %v1648, 0.0
        %v1655 = vmax.f32 %v1651, 0.0
        %v1656 = vpack.c.bf16 %v1655, %v1654
        %v1657 = vld [vmem:[%s433] sm:$0xf]
        %v1658 = vld [vmem:[%s433 + $0x4] sm:$0xf]
        %v1659 = vld [vmem:[%s433 + $0x8] sm:$0xf]
        %v1660 = vld [vmem:[%s433 + $0xc] sm:$0xf]
        %v1661 = vld [vmem:[%s433 + $0x10] sm:$0xf]
        %v1662 = vld [vmem:[%s433 + $0x14] sm:$0xf]
        %v1663 = vld [vmem:[%s433 + $0x18] sm:$0xf]
        %v1664 = vld [vmem:[%s433 + $0x1c] sm:$0xf]
        %v1665 = vlaneseq
        %v1666 = vshrl.u32 %v1665, 7
        %v1667 = vsub.s32 3, %v1666
        %v1668 = vrot.slane %v458, %v1667
        %v1677 = vunpack.c.l.b16 %v1657
        %v1678 = vunpack.c.l.b16 %v1658
        %v1679 = vunpack.c.l.b16 %v1659
        %v1680 = vunpack.c.l.b16 %v1660
        %v1681 = vunpack.c.l.b16 %v1661
        %v1682 = vunpack.c.l.b16 %v1662
        %v1683 = vunpack.c.l.b16 %v1663
        %v1684 = vunpack.c.l.b16 %v1664
        %v1685 = vpack.c.b16 %v1678, %v1677
        %v1686 = vpack.c.b16 %v1680, %v1679
        %v1687 = vpack.c.b16 %v1682, %v1681
        %v1688 = vpack.c.b16 %v1684, %v1683
        %vm1693 = vcmask 523264
        %v1695 = vsel %vm1693, %v1656, 0
        %1697 = vmatprep.subr.bf16.mxu0 0
        %1698 = vmatpush1.bf16.msra.mxu0 %v1685
        %1699 = vmatprep.subr.bf16.mxu0 0
        %1700 = vmatpush1.bf16.msra.mxu0 %v1686
        %1701 = vmatprep.subr.bf16.mxu0 0
        %1702 = vmatpush1.bf16.msra.mxu0 %v1687
        %1703 = vmatprep.subr.bf16.mxu0 0
        %1704 = vmatpush1.bf16.msra.mxu0 %v1688
        %1705 = vmatprep.subr.bf16.mxu0 0
        %1706 = vmatpush1.bf16.msra.mxu0 0
        %1707 = vmatprep.subr.bf16.mxu0 0
        %1708 = vmatpush1.bf16.msra.mxu0 0
        %1709 = vmatprep.subr.bf16.mxu0 0
        %1710 = vmatpush1.bf16.msra.mxu0 0
        %1711 = vmatprep.subr.bf16.mxu0 0
        %1712 = vmatpush1.bf16.msra.mxu0 0
        %1713 = vmatprep.subr.bf16.mxu0 0
        %1714 = vmatpush1.bf16.msra.mxu0 0
        %1715 = vmatprep.subr.bf16.mxu0 0
        %1716 = vmatpush1.bf16.msra.mxu0 0
        %1717 = vmatprep.subr.bf16.mxu0 0
        %1718 = vmatpush1.bf16.msra.mxu0 0
        %1719 = vmatprep.subr.bf16.mxu0 0
        %1720 = vmatpush1.bf16.msra.mxu0 0
        %1721 = vmatprep.subr.bf16.mxu0 0
        %1722 = vmatpush1.bf16.msra.mxu0 0
        %1723 = vmatprep.subr.bf16.mxu0 0
        %1724 = vmatpush1.bf16.msra.mxu0 0
        %1725 = vmatprep.subr.bf16.mxu0 0
        %1726 = vmatpush1.bf16.msra.mxu0 0
        %1727 = vmatprep.subr.bf16.mxu0 0
        %1728 = vmatpush1.bf16.msra.mxu0 0
        %1729 = vmatprep.mubr.bf16.mxu0 0
        %1730 = vmatmul.mubr.bf16.gmra.mrb[0].mxu0 %v1695
        %v1731 = vpop.f32.mrb[0].mxu0
        %v1732 = vadd.f32 %v1668, %v1731
        %v1733 = vpop.f32.mrb[0].mxu0
        %v1734 = vpop.f32.mrb[0].mxu0
        %v1735 = vadd.f32 %v1668, %v1734
        %v1736 = vpop.f32.mrb[0].mxu0
        %1737 = vdwg.mxu0
        %v1738 = vadd.f32 %v1732, %v1584
        %v1739 = vadd.f32 %v1735, %v1585
        %v1740 = vsel %vm476, %v1738, 0.0
        %1741 = vadd.xlane.f32.xlu0 %v1740
        %v1742 = vpop.xlane.xlu0 %1741
        %v1743 = vsel %vm476, %v1739, 0.0
        %1744 = vadd.xlane.f32.xlu0 %v1743
        %v1745 = vpop.xlane.xlu0 %1744
        %v1746 = vmul.f32 %v1742, %v1538
        %v1747 = vmul.f32 %v1745, %v1538
        %v1748 = vsub.f32 %v1738, %v1746
        %v1749 = vsub.f32 %v1739, %v1747
        %v1750 = vmul.f32 %v1748, %v1748
        %v1751 = vmul.f32 %v1749, %v1749
        %v1752 = vsel %vm476, %v1750, 0.0
        %1753 = vadd.xlane.f32.xlu0 %v1752
        %v1754 = vpop.xlane.xlu0 %1753
        %v1755 = vsel %vm476, %v1751, 0.0
        %1756 = vadd.xlane.f32.xlu0 %v1755
        %v1757 = vpop.xlane.xlu0 %1756
        %v1758 = vmul.f32 %v1754, %v1551
        %v1759 = vmul.f32 %v1757, %v1551
        %v1760 = vrsqrt.pop %v1758
        %v1761 = vmul.f32 %v1758, %v1760
        %vm1762 = vcmp.eq.f32.partialorder %v1758, inf
        %v1763 = vsel %vm1762, %v1758, %v1761
        %vm1764 = vcmp.eq.f32.partialorder %v1758, 0.0
        %v1765 = vand.u32 %v1758, 2147483648
        %v1766 = vsel %vm1764, %v1765, %v1763
        %v1767 = vrsqrt.pop %v1759
        %v1768 = vmul.f32 %v1759, %v1767
        %vm1769 = vcmp.eq.f32.partialorder %v1759, inf
        %v1770 = vsel %vm1769, %v1759, %v1768
        %vm1771 = vcmp.eq.f32.partialorder %v1759, 0.0
        %v1772 = vand.u32 %v1759, 2147483648
        %v1773 = vsel %vm1771, %v1772, %v1770
        %v1774 = vadd.f32 %v1766, 0.001
        %v1775 = vadd.f32 %v1773, 0.001
        %v1776 = vrcp.pop %v1774
        %v1777 = vrcp.pop %v1775
        %v1778 = vmul.f32 %v1748, %v1776
        %v1779 = vmul.f32 %v1749, %v1777
        %v1780 = vlaneseq
        %v1781 = vshrl.u32 %v1780, 7
        %v1782 = vsub.s32 4, %v1781
        %v1783 = vrot.slane %v458, %v1782
        %v1784 = vmul.f32 %v1778, %v1783
        %v1785 = vmul.f32 %v1779, %v1783
        %v1786 = vlaneseq
        %v1787 = vshrl.u32 %v1786, 7
        %v1788 = vsub.s32 5, %v1787
        %v1789 = vrot.slane %v458, %v1788
        %v1790 = vadd.f32 %v1784, %v1789
        %v1791 = vadd.f32 %v1785, %v1789
        %1792 = vst.msk [vmem:[#allocation2] sm:$0xff] %vm476, %v1790
        %1793 = vst.msk [vmem:[#allocation2 + $0x8] sm:$0xff] %vm476, %v1791
        %p1794 = scmp.eq.s32.totalorder %s25, 1
        // Predicated region
        $region57: #{graph_encoder_forward.1} parent=51 // pred_check
          %p1795 = pneg %p1794
        $region58: #{graph_encoder_forward.1} parent=51 // pred_check_branch
          %1797 = sbr.rel (%p1795) target = $region60
        $region59: #{graph_encoder_forward.1} parent=51 // pred_region
          %1798 = vst.msk [vmem:[#allocation3] sm:$0xff] %vm476, %v1790
          %1799 = vst.msk [vmem:[#allocation3 + $0x8] sm:$0xff] %vm476, %v1791
        $region60: #{graph_encoder_forward.1} parent=51 // pred_fallthru
          _
        // Predicated region
        $region61: #{graph_encoder_forward.1} parent=51 // pred_check
          %p1800 = pneg %p258
        $region62: #{graph_encoder_forward.1} parent=51 // pred_check_branch
          %1802 = sbr.rel (%p1800) target = $region64
        $region63: #{graph_encoder_forward.1} parent=51 // pred_region
          %s1803 = smul.u32 2, %s24
          %s1805 = ssub.s32 256, 256
          %1806 = vsyncadd [#allocation4], %s1805
          %s1807 = smul.addr %s1803, 128
          %s1808 = scalar_lea.hbm %s8, %s1807
          %s1809 = sshll.u32 [#allocation3], 4
          %s1810 = int_to_ptr.vmem [resolvable:$true] %s1809
          %1815 = dma.vmem_to_hbm [thread:$0]  %s1810, 256, %s1808, [#allocation4], 128, 128, 8
        $region64: #{graph_encoder_forward.1} parent=51 // pred_fallthru
          _
        // Predicated region
        $region65: #{graph_encoder_forward.1} parent=51 // pred_check
          %p1816 = pneg %p258
        $region66: #{graph_encoder_forward.1} parent=51 // pred_check_branch
          %1818 = sbr.rel (%p1816) target = $region68
        $region67: #{graph_encoder_forward.1} parent=51 // pred_region
          %1819 = dma.done [#allocation4], 256
        $region68: #{graph_encoder_forward.1} parent=51 // pred_fallthru
          _
      $region52: #{graph_encoder_forward.1} parent=5 // pred_fallthru
        _
      %p1820 = scmp.le.s32.totalorder 2, %s15
      // Predicated region
      $region69: #{graph_encoder_forward.1} parent=5 // pred_check
        %p1821 = pneg %p1820
      $region70: #{graph_encoder_forward.1} parent=5 // pred_check_branch
        %1823 = sbr.rel (%p1821) target = $region72
      $region71: #{graph_encoder_forward.1} parent=5 // pred_region
        %s1824 = ssub.s32 %s15, 2
      $region72: #{graph_encoder_forward.1} parent=5 // pred_fallthru
        _
    $region6: #{graph_encoder_forward.1} parent=1 // loop_footer
      %s19 = sadd.s32 1, %s15
    $region7: #{graph_encoder_forward.1} parent=1 // loop_footer_branch
      %14 = sbr.rel target = $region3
    $region8: #{graph_encoder_forward.1} parent=1 // loop_exit
      _
    %1825 = vsyncpa [#allocation4], 1
    %s1826 = scalar_lea.sflag [#allocation4], 1
    %1827 = vsyncpa %s1826, 1

</llo_original>
